<compile_context>
chip_gen: v7x
topology: tpu7x:2x2x1
jax: 0.10.0
libtpu: 0.0.40
codegen_flags: <defaults>
</compile_context>

<pallas_src>
import functools
import math

import jax
import jax.numpy as jnp
from jax import lax
from jax.experimental import pallas as pl
from jax.experimental.pallas import tpu as pltpu

_CP = 8      # conv channels padded to one sublane group
_APAD = 8    # FC output rows (actions) padded to one sublane group


def _fused_categorical_cnn_kernel(x_ref, wconv_ref, bias_ref, wfcz_ref, sel_ref,
                                  out_ref, im_ref, s1_ref, *, img_w, ksize):
    """(pre-scaled x) -> conv3x3+tanh -> conv3x3+tanh -> FC -> log_softmax."""
    CP, PADW = x_ref.shape            # bf16 padded input slab (channels x lanes)
    KKCP, MT = im_ref.shape           # stacked im2col operand (k*k*CP x B*H*W)
    A_pad = wfcz_ref.shape[1]
    pad_cols = PADW - MT              # >= (k-1)*(W+1), zero lanes in the slabs

    def stage_im2col(src_ref):
        # Stack the k*k statically shifted (CP, MT) windows of the padded bf16
        # slab so each conv is a single K=k*k*CP MXU matmul (accumulation
        # happens inside the systolic array, not on the VPU).
        for t in range(ksize * ksize):
            shift = (t // ksize) * img_w + (t % ksize)
            im_ref[pl.ds(t * CP, CP), :] = src_ref[:, pl.ds(shift, MT)]

    # --- Conv0: one bf16 K=72 matmul + bias + tanh; single bf16 cast at the
    #     slab write.  Pad lanes are written as zeros so border garbage that
    #     conv1 reads stays finite (tanh-bounded) and never turns into NaN.
    stage_im2col(x_ref)
    y1 = jnp.dot(wconv_ref[0], im_ref[...], preferred_element_type=jnp.float32)
    y1 = jnp.tanh(y1 + bias_ref[:, 0:1])
    s1_ref[...] = jnp.concatenate(
        [y1.astype(jnp.bfloat16), jnp.zeros((CP, pad_cols), jnp.bfloat16)],
        axis=-1)

    # --- Conv1: same structure, reusing the im2col scratch.
    stage_im2col(s1_ref)
    y2 = jnp.dot(wconv_ref[1], im_ref[...], preferred_element_type=jnp.float32)
    y2 = jnp.tanh(y2 + bias_ref[:, 1:2])                       # (CP, MT) f32

    # --- FC.  Stage 1 (VPU): per-action, per-position channel combine against
    #     the pre-scattered wfcz (torch's crop-to-valid + NCHW flatten folded
    #     in at pack time; zeros at invalid positions / padded channels).
    z = wfcz_ref[0] * y2[0:1, :]                               # (A_pad, MT)
    for c in range(1, CP):
        z = z + wfcz_ref[c] * y2[c:c + 1, :]
    #     Stage 2 (MXU): per-batch lane reduction as ONE matmul against the
    #     packed {0,1} batch-selection weight (replaces the old per-batch
    #     broadcast-multiplies + XLU cross-lane reduces).
    logits_t = jnp.dot(z, sel_ref[...],
                       preferred_element_type=jnp.float32)     # (A_pad, B)
    logits_t = logits_t + bias_ref[:, 2:3]    # padded action rows carry -1e30

    # --- Categorical(logits=...).logits == normalized log-probs.  Softmax is
    #     over the action (sublane) axis; -1e30 padded rows contribute exp()=0.
    m = jnp.max(logits_t, axis=0, keepdims=True)
    lse = m + jnp.log(jnp.sum(jnp.exp(logits_t - m), axis=0, keepdims=True))
    out_ref[...] = logits_t - lse


def categorical_cnn_forward(x, packed, *, kernel_size=3):
    """x: (B, C, H, W) images in [0, 255]. Returns (B, action_dim) log-probs."""
    B, C0, H, W = x.shape
    HW = H * W
    MT = B * HW
    KK = kernel_size * kernel_size
    A_pad = packed["wfcz"].shape[1]
    action_dim = packed["action_dim"]

    # Layout plumbing stays in the wrapper (XLA), not the kernel: /255 scale,
    # channels-major batch concat on lanes, zero pad, one bf16 cast.
    max_shift = (kernel_size - 1) * (W + 1)
    pad_lanes = ((max_shift + 127) // 128) * 128   # review fix: derived, not 128
    padw = MT + pad_lanes
    xs = (x.astype(jnp.float32) * jnp.float32(1.0 / 255.0)).reshape(B, C0, HW)
    xs = jnp.transpose(xs, (1, 0, 2)).reshape(C0, MT)
    xs = jnp.pad(xs, ((0, _CP - C0), (0, pad_lanes))).astype(jnp.bfloat16)

    kern = functools.partial(_fused_categorical_cnn_kernel,
                             img_w=W, ksize=kernel_size)
    raw = pl.pallas_call(
        kern,
        out_shape=jax.ShapeDtypeStruct((A_pad, B), jnp.float32),
        grid=(1,),
        in_specs=[
            pl.BlockSpec((_CP, padw), lambda i: (0, 0)),            # x slab
            pl.BlockSpec((2, _CP, KK * _CP), lambda i: (0, 0, 0)),  # both convs
            pl.BlockSpec((_CP, 3), lambda i: (0, 0)),               # b0|b1|bfc
            pl.BlockSpec((_CP, A_pad, MT), lambda i: (0, 0, 0)),    # FC weight
            pl.BlockSpec((MT, B), lambda i: (0, 0)),                # batch sel
        ],
        out_specs=pl.BlockSpec((A_pad, B), lambda i: (0, 0)),
        scratch_shapes=[
            pltpu.VMEM((KK * _CP, MT), jnp.bfloat16),   # stacked im2col operand
            pltpu.VMEM((_CP, padw), jnp.bfloat16),      # padded conv0-out slab
        ],
        # At B=2 everything fits one step; when the batch scales, tile it over
        # a "parallel" grid axis (v7x: 2 TCs) sized for 64 MiB VMEM per core.
        compiler_params=pltpu.CompilerParams(
            dimension_semantics=("arbitrary",)),
    )(xs, packed["wconv"], packed["biases"], packed["wfcz"], packed["sel"])
    # Kernel emits (A_pad, B) normalized log-probs; crop + transpose is layout.
    return raw[:action_dim, :].T


def pack_params(params, *, img_hw, kernel_size, hidden_channels, action_dim,
                batch):
    """One-time packing of torch-layout params into kernel-friendly layouts."""
    H, W = img_hw
    k = kernel_size
    KK = k * k
    OC0, OC1 = hidden_channels
    C0 = params["conv0_w"].shape[1]
    HW = H * W

    # Review correctness item: the slab/crop trick assumes exactly two stride-1
    # VALID convs of the SAME kernel size and a bounded nonlinearity (tanh), so
    # border garbage stays finite and never reaches a valid FC input position.
    OH = H - 2 * (k - 1)
    OW = W - 2 * (k - 1)
    assert OH > 0 and OW > 0, "image too small for two VALID convs"
    assert params["fc_w"].shape[0] == OC1 * OH * OW, (
        "fc_w inconsistent with two same-kernel stride-1 VALID conv layers")
    assert C0 <= _CP and OC0 <= _CP and OC1 <= _CP and action_dim <= _APAD

    def stack_conv(w, oc, cin):
        # (oc, cin, k, k) -> (CP, KK*CP): column t*CP + c holds tap t = di*k+dj
        # for input channel c, matching the kernel's stacked im2col rows.
        taps = jnp.transpose(w, (2, 3, 0, 1)).reshape(KK, oc, cin)
        full = jnp.zeros((KK, _CP, _CP), jnp.float32).at[:, :oc, :cin].set(taps)
        return jnp.transpose(full, (1, 0, 2)).reshape(_CP, KK * _CP)

    wconv = jnp.stack([stack_conv(params["conv0_w"], OC0, C0),
                       stack_conv(params["conv1_w"], OC1, OC0)]
                      ).astype(jnp.bfloat16)                  # (2, CP, KK*CP)

    # Merged bias block (one DMA instead of three): columns = [b0 | b1 | b_fc].
    # Padded action rows of the FC bias get -1e30 so they vanish in softmax.
    biases = jnp.zeros((_CP, 3), jnp.float32)
    biases = biases.at[:OC0, 0].set(params["conv0_b"])
    biases = biases.at[:OC1, 1].set(params["conv1_b"])
    biases = biases.at[:, 2].set(-1e30)
    biases = biases.at[:action_dim, 2].set(params["fc_b"])

    # FC weight: fold torch's crop-to-valid + NCHW flatten into a scattered
    # (CP, A_pad, H*W) weight (zeros at invalid spatial positions / padded
    # channels / padded actions), tiled across the batch blocks on lanes.
    fcw = params["fc_w"].reshape(OC1, OH, OW, action_dim)
    wsc = jnp.zeros((_CP, _APAD, H, W), jnp.float32)
    wsc = wsc.at[:OC1, :action_dim, :OH, :OW].set(
        jnp.transpose(fcw, (0, 3, 1, 2)))
    wfcz = jnp.tile(wsc.reshape(_CP, _APAD, HW), (1, 1, batch))

    # {0,1} batch-block selection weight: RHS of the FC lane-reduction matmul.
    sel = (jnp.arange(batch * HW)[:, None] // HW
           == jnp.arange(batch)[None, :]).astype(jnp.float32)  # (B*HW, B)

    return dict(wconv=wconv, biases=biases, wfcz=wfcz, sel=sel,
                action_dim=action_dim)


def reference_forward(x, params):
    """Plain-JAX reference with matching bf16-operand / f32-accumulate convs."""
    dn = ("NCHW", "OIHW", "NCHW")
    h = (x * jnp.float32(1.0 / 255.0)).astype(jnp.bfloat16)
    h = lax.conv_general_dilated(h, params["conv0_w"].astype(jnp.bfloat16),
                                 (1, 1), "VALID", dimension_numbers=dn,
                                 preferred_element_type=jnp.float32)
    h = jnp.tanh(h + params["conv0_b"][None, :, None, None]).astype(jnp.bfloat16)
    h = lax.conv_general_dilated(h, params["conv1_w"].astype(jnp.bfloat16),
                                 (1, 1), "VALID", dimension_numbers=dn,
                                 preferred_element_type=jnp.float32)
    h = jnp.tanh(h + params["conv1_b"][None, :, None, None])
    flat = h.reshape(h.shape[0], -1)            # NCHW-order flatten (torch view)
    logits = jnp.dot(flat, params["fc_w"],
                     precision=lax.Precision.HIGHEST) + params["fc_b"]
    return jax.nn.log_softmax(logits, axis=-1)


if __name__ == "__main__":
    # Small shapes consistent with the module: batch=2, 3-channel 16x16 image.
    B, C, H, W = 2, 3, 16, 16
    kernel_size = 3
    hidden_channels = (4, 8)
    action_dim = 5

    key = jax.random.PRNGKey(0)
    k_x, k_c0, k_c1, k_fc = jax.random.split(key, 4)

    # Image-like input in [0, 255].
    x = jax.random.uniform(k_x, (B, C, H, W), jnp.float32, 0.0, 255.0)

    def xavier_uniform(k, shape, fan_in, fan_out):
        bound = math.sqrt(6.0 / (fan_in + fan_out))
        return jax.random.uniform(k, shape, jnp.float32, -bound, bound)

    OH = H - 2 * (kernel_size - 1)
    OW = W - 2 * (kernel_size - 1)
    flat_dim = hidden_channels[1] * OH * OW              # 8 * 12 * 12 = 1152
    params = {
        "conv0_w": xavier_uniform(k_c0, (hidden_channels[0], C, 3, 3),
                                  C * 9, hidden_channels[0] * 9),
        "conv0_b": jnp.zeros((hidden_channels[0],), jnp.float32),
        "conv1_w": xavier_uniform(k_c1,
                                  (hidden_channels[1], hidden_channels[0], 3, 3),
                                  hidden_channels[0] * 9, hidden_channels[1] * 9),
        "conv1_b": jnp.zeros((hidden_channels[1],), jnp.float32),
        "fc_w": xavier_uniform(k_fc, (flat_dim, action_dim), flat_dim, action_dim),
        "fc_b": jnp.zeros((action_dim,), jnp.float32),
    }

    # One-time (init-time) repacking of parameters into kernel layouts.
    packed = pack_params(params, img_hw=(H, W), kernel_size=kernel_size,
                         hidden_channels=hidden_channels, action_dim=action_dim,
                         batch=B)

    forward = jax.jit(lambda inp: categorical_cnn_forward(
        inp, packed, kernel_size=kernel_size))
    log_probs = jax.block_until_ready(forward(x))

    assert log_probs.shape == (B, action_dim)
    # Categorical log-probs must sum (in prob space) to 1 per row.
    assert jnp.allclose(jnp.sum(jnp.exp(log_probs), axis=-1), 1.0, atol=1e-4)
    # Must match the plain-JAX reference of the same forward.  Tolerance covers
    # Mosaic-vs-XLA differences in tanh / MXU pass ordering on top of the
    # (matched) bf16 conv operands and the f32 MXU FC reduction.
    ref = reference_forward(x, params)
    max_diff = float(jnp.max(jnp.abs(log_probs - ref)))
    assert max_diff < 5e-3, f"kernel/reference mismatch, max abs diff={max_diff}"
    print("KERNEL_OK")
</pallas_src>

<mosaic_0001>
module attributes {stable_mosaic.version = 11 : i64} {
  func.func @_fused_categorical_cnn_kernel(%arg0: i32, %arg1: memref<8x640xbf16, #tpu.memory_space<vmem>>, %arg2: memref<2x8x72xbf16, #tpu.memory_space<vmem>>, %arg3: memref<8x3xf32, #tpu.memory_space<vmem>>, %arg4: memref<8x8x512xf32, #tpu.memory_space<vmem>>, %arg5: memref<512x2xf32, #tpu.memory_space<vmem>>, %arg6: memref<8x2xf32, #tpu.memory_space<vmem>>, %arg7: memref<72x512xbf16, #tpu.memory_space<vmem>>, %arg8: memref<8x640xbf16, #tpu.memory_space<vmem>>) attributes {dimension_semantics = [#tpu.dimension_semantics<arbitrary>], iteration_bounds = array<i64: 1>, scalar_prefetch = 0 : i64, scratch_operands = 2 : i64, tpu.core_type = #tpu.core_type<tc>, window_params = [{pipeline_mode = #tpu.pipeline_mode<synchronous>, transform_indices = @transform_0, window_bounds = array<i64: 8, 640>}, {pipeline_mode = #tpu.pipeline_mode<synchronous>, transform_indices = @transform_1, window_bounds = array<i64: 2, 8, 72>}, {pipeline_mode = #tpu.pipeline_mode<synchronous>, transform_indices = @transform_2, window_bounds = array<i64: 8, 3>}, {pipeline_mode = #tpu.pipeline_mode<synchronous>, transform_indices = @transform_3, window_bounds = array<i64: 8, 8, 512>}, {pipeline_mode = #tpu.pipeline_mode<synchronous>, transform_indices = @transform_4, window_bounds = array<i64: 512, 2>}, {pipeline_mode = #tpu.pipeline_mode<synchronous>, transform_indices = @transform_5, window_bounds = array<i64: 8, 2>}]} {
    %c0 = arith.constant 0 : index
    %c0_0 = arith.constant 0 : index
    %0 = vector.load %arg1[%c0, %c0_0] : memref<8x640xbf16, #tpu.memory_space<vmem>>, vector<8x512xbf16>
    %c0_1 = arith.constant 0 : index
    %c0_2 = arith.constant 0 : index
    %1 = vector.load %arg7[%c0_1, %c0_2] : memref<72x512xbf16, #tpu.memory_space<vmem>>, vector<8x512xbf16>
    tpu.vector_store %arg7[%c0_1, %c0_2], %0 {strides = array<i32>} : memref<72x512xbf16, #tpu.memory_space<vmem>>, vector<8x512xbf16>,
    %c0_3 = arith.constant 0 : index
    %c1 = arith.constant 1 : index
    %2 = vector.load %arg1[%c0_3, %c1] : memref<8x640xbf16, #tpu.memory_space<vmem>>, vector<8x512xbf16>
    %c8 = arith.constant 8 : index
    %c0_4 = arith.constant 0 : index
    %3 = vector.load %arg7[%c8, %c0_4] : memref<72x512xbf16, #tpu.memory_space<vmem>>, vector<8x512xbf16>
    tpu.vector_store %arg7[%c8, %c0_4], %2 {strides = array<i32>} : memref<72x512xbf16, #tpu.memory_space<vmem>>, vector<8x512xbf16>,
    %c0_5 = arith.constant 0 : index
    %c2 = arith.constant 2 : index
    %4 = vector.load %arg1[%c0_5, %c2] : memref<8x640xbf16, #tpu.memory_space<vmem>>, vector<8x512xbf16>
    %c16 = arith.constant 16 : index
    %c0_6 = arith.constant 0 : index
    %5 = vector.load %arg7[%c16, %c0_6] : memref<72x512xbf16, #tpu.memory_space<vmem>>, vector<8x512xbf16>
    tpu.vector_store %arg7[%c16, %c0_6], %4 {strides = array<i32>} : memref<72x512xbf16, #tpu.memory_space<vmem>>, vector<8x512xbf16>,
    %c0_7 = arith.constant 0 : index
    %c16_8 = arith.constant 16 : index
    %6 = vector.load %arg1[%c0_7, %c16_8] : memref<8x640xbf16, #tpu.memory_space<vmem>>, vector<8x512xbf16>
    %c24 = arith.constant 24 : index
    %c0_9 = arith.constant 0 : index
    %7 = vector.load %arg7[%c24, %c0_9] : memref<72x512xbf16, #tpu.memory_space<vmem>>, vector<8x512xbf16>
    tpu.vector_store %arg7[%c24, %c0_9], %6 {strides = array<i32>} : memref<72x512xbf16, #tpu.memory_space<vmem>>, vector<8x512xbf16>,
    %c0_10 = arith.constant 0 : index
    %c17 = arith.constant 17 : index
    %8 = vector.load %arg1[%c0_10, %c17] : memref<8x640xbf16, #tpu.memory_space<vmem>>, vector<8x512xbf16>
    %c32 = arith.constant 32 : index
    %c0_11 = arith.constant 0 : index
    %9 = vector.load %arg7[%c32, %c0_11] : memref<72x512xbf16, #tpu.memory_space<vmem>>, vector<8x512xbf16>
    tpu.vector_store %arg7[%c32, %c0_11], %8 {strides = array<i32>} : memref<72x512xbf16, #tpu.memory_space<vmem>>, vector<8x512xbf16>,
    %c0_12 = arith.constant 0 : index
    %c18 = arith.constant 18 : index
    %10 = vector.load %arg1[%c0_12, %c18] : memref<8x640xbf16, #tpu.memory_space<vmem>>, vector<8x512xbf16>
    %c40 = arith.constant 40 : index
    %c0_13 = arith.constant 0 : index
    %11 = vector.load %arg7[%c40, %c0_13] : memref<72x512xbf16, #tpu.memory_space<vmem>>, vector<8x512xbf16>
    tpu.vector_store %arg7[%c40, %c0_13], %10 {strides = array<i32>} : memref<72x512xbf16, #tpu.memory_space<vmem>>, vector<8x512xbf16>,
    %c0_14 = arith.constant 0 : index
    %c32_15 = arith.constant 32 : index
    %12 = vector.load %arg1[%c0_14, %c32_15] : memref<8x640xbf16, #tpu.memory_space<vmem>>, vector<8x512xbf16>
    %c48 = arith.constant 48 : index
    %c0_16 = arith.constant 0 : index
    %13 = vector.load %arg7[%c48, %c0_16] : memref<72x512xbf16, #tpu.memory_space<vmem>>, vector<8x512xbf16>
    tpu.vector_store %arg7[%c48, %c0_16], %12 {strides = array<i32>} : memref<72x512xbf16, #tpu.memory_space<vmem>>, vector<8x512xbf16>,
    %c0_17 = arith.constant 0 : index
    %c33 = arith.constant 33 : index
    %14 = vector.load %arg1[%c0_17, %c33] : memref<8x640xbf16, #tpu.memory_space<vmem>>, vector<8x512xbf16>
    %c56 = arith.constant 56 : index
    %c0_18 = arith.constant 0 : index
    %15 = vector.load %arg7[%c56, %c0_18] : memref<72x512xbf16, #tpu.memory_space<vmem>>, vector<8x512xbf16>
    tpu.vector_store %arg7[%c56, %c0_18], %14 {strides = array<i32>} : memref<72x512xbf16, #tpu.memory_space<vmem>>, vector<8x512xbf16>,
    %c0_19 = arith.constant 0 : index
    %c34 = arith.constant 34 : index
    %16 = vector.load %arg1[%c0_19, %c34] : memref<8x640xbf16, #tpu.memory_space<vmem>>, vector<8x512xbf16>
    %c64 = arith.constant 64 : index
    %c0_20 = arith.constant 0 : index
    %17 = vector.load %arg7[%c64, %c0_20] : memref<72x512xbf16, #tpu.memory_space<vmem>>, vector<8x512xbf16>
    tpu.vector_store %arg7[%c64, %c0_20], %16 {strides = array<i32>} : memref<72x512xbf16, #tpu.memory_space<vmem>>, vector<8x512xbf16>,
    %c0_21 = arith.constant 0 : index
    %c0_22 = arith.constant 0 : index
    %c0_23 = arith.constant 0 : index
    %18 = vector.load %arg2[%c0_21, %c0_22, %c0_23] : memref<2x8x72xbf16, #tpu.memory_space<vmem>>, vector<1x8x72xbf16>
    %19 = vector.shape_cast %18 : vector<1x8x72xbf16> to vector<8x72xbf16>
    %c0_24 = arith.constant 0 : index
    %c0_25 = arith.constant 0 : index
    %20 = vector.load %arg7[%c0_24, %c0_25] : memref<72x512xbf16, #tpu.memory_space<vmem>>, vector<72x512xbf16>
    %cst = arith.constant dense<0.000000e+00> : vector<8x512xf32>
    %21 = tpu.matmul %19, %20, %cst {dimension_numbers = #tpu.dot_dimension_numbers<[1], [0], [0], [1], [0, 0, 1, 1], [], []>} : vector<8x72xbf16>, vector<72x512xbf16>, vector<8x512xf32> -> vector<8x512xf32>
    %c0_26 = arith.constant 0 : index
    %c0_27 = arith.constant 0 : index
    %22 = vector.load %arg3[%c0_26, %c0_27] : memref<8x3xf32, #tpu.memory_space<vmem>>, vector<8x1xf32>
    %23 = vector.broadcast %22 : vector<8x1xf32> to vector<8x512xf32>
    %24 = arith.addf %21, %23 : vector<8x512xf32>
    %25 = math.tanh %24 : vector<8x512xf32>
    %26 = arith.truncf %25 : vector<8x512xf32> to vector<8x512xbf16>
    %cst_28 = arith.constant 0.000000e+00 : bf16
    %27 = vector.broadcast %cst_28 : bf16 to vector<8x128xbf16>
    %28 = tpu.concatenate %26, %27 in 1 : vector<8x512xbf16>, vector<8x128xbf16> -> vector<8x640xbf16>
    %c0_29 = arith.constant 0 : index
    %c0_30 = arith.constant 0 : index
    %29 = vector.load %arg8[%c0_29, %c0_30] : memref<8x640xbf16, #tpu.memory_space<vmem>>, vector<8x640xbf16>
    tpu.vector_store %arg8[%c0_29, %c0_30], %28 {strides = array<i32>} : memref<8x640xbf16, #tpu.memory_space<vmem>>, vector<8x640xbf16>,
    %c0_31 = arith.constant 0 : index
    %c0_32 = arith.constant 0 : index
    %30 = vector.load %arg8[%c0_31, %c0_32] : memref<8x640xbf16, #tpu.memory_space<vmem>>, vector<8x512xbf16>
    %c0_33 = arith.constant 0 : index
    %c0_34 = arith.constant 0 : index
    %31 = vector.load %arg7[%c0_33, %c0_34] : memref<72x512xbf16, #tpu.memory_space<vmem>>, vector<8x512xbf16>
    tpu.vector_store %arg7[%c0_33, %c0_34], %30 {strides = array<i32>} : memref<72x512xbf16, #tpu.memory_space<vmem>>, vector<8x512xbf16>,
    %c0_35 = arith.constant 0 : index
    %c1_36 = arith.constant 1 : index
    %32 = vector.load %arg8[%c0_35, %c1_36] : memref<8x640xbf16, #tpu.memory_space<vmem>>, vector<8x512xbf16>
    %c8_37 = arith.constant 8 : index
    %c0_38 = arith.constant 0 : index
    %33 = vector.load %arg7[%c8_37, %c0_38] : memref<72x512xbf16, #tpu.memory_space<vmem>>, vector<8x512xbf16>
    tpu.vector_store %arg7[%c8_37, %c0_38], %32 {strides = array<i32>} : memref<72x512xbf16, #tpu.memory_space<vmem>>, vector<8x512xbf16>,
    %c0_39 = arith.constant 0 : index
    %c2_40 = arith.constant 2 : index
    %34 = vector.load %arg8[%c0_39, %c2_40] : memref<8x640xbf16, #tpu.memory_space<vmem>>, vector<8x512xbf16>
    %c16_41 = arith.constant 16 : index
    %c0_42 = arith.constant 0 : index
    %35 = vector.load %arg7[%c16_41, %c0_42] : memref<72x512xbf16, #tpu.memory_space<vmem>>, vector<8x512xbf16>
    tpu.vector_store %arg7[%c16_41, %c0_42], %34 {strides = array<i32>} : memref<72x512xbf16, #tpu.memory_space<vmem>>, vector<8x512xbf16>,
    %c0_43 = arith.constant 0 : index
    %c16_44 = arith.constant 16 : index
    %36 = vector.load %arg8[%c0_43, %c16_44] : memref<8x640xbf16, #tpu.memory_space<vmem>>, vector<8x512xbf16>
    %c24_45 = arith.constant 24 : index
    %c0_46 = arith.constant 0 : index
    %37 = vector.load %arg7[%c24_45, %c0_46] : memref<72x512xbf16, #tpu.memory_space<vmem>>, vector<8x512xbf16>
    tpu.vector_store %arg7[%c24_45, %c0_46], %36 {strides = array<i32>} : memref<72x512xbf16, #tpu.memory_space<vmem>>, vector<8x512xbf16>,
    %c0_47 = arith.constant 0 : index
    %c17_48 = arith.constant 17 : index
    %38 = vector.load %arg8[%c0_47, %c17_48] : memref<8x640xbf16, #tpu.memory_space<vmem>>, vector<8x512xbf16>
    %c32_49 = arith.constant 32 : index
    %c0_50 = arith.constant 0 : index
    %39 = vector.load %arg7[%c32_49, %c0_50] : memref<72x512xbf16, #tpu.memory_space<vmem>>, vector<8x512xbf16>
    tpu.vector_store %arg7[%c32_49, %c0_50], %38 {strides = array<i32>} : memref<72x512xbf16, #tpu.memory_space<vmem>>, vector<8x512xbf16>,
    %c0_51 = arith.constant 0 : index
    %c18_52 = arith.constant 18 : index
    %40 = vector.load %arg8[%c0_51, %c18_52] : memref<8x640xbf16, #tpu.memory_space<vmem>>, vector<8x512xbf16>
    %c40_53 = arith.constant 40 : index
    %c0_54 = arith.constant 0 : index
    %41 = vector.load %arg7[%c40_53, %c0_54] : memref<72x512xbf16, #tpu.memory_space<vmem>>, vector<8x512xbf16>
    tpu.vector_store %arg7[%c40_53, %c0_54], %40 {strides = array<i32>} : memref<72x512xbf16, #tpu.memory_space<vmem>>, vector<8x512xbf16>,
    %c0_55 = arith.constant 0 : index
    %c32_56 = arith.constant 32 : index
    %42 = vector.load %arg8[%c0_55, %c32_56] : memref<8x640xbf16, #tpu.memory_space<vmem>>, vector<8x512xbf16>
    %c48_57 = arith.constant 48 : index
    %c0_58 = arith.constant 0 : index
    %43 = vector.load %arg7[%c48_57, %c0_58] : memref<72x512xbf16, #tpu.memory_space<vmem>>, vector<8x512xbf16>
    tpu.vector_store %arg7[%c48_57, %c0_58], %42 {strides = array<i32>} : memref<72x512xbf16, #tpu.memory_space<vmem>>, vector<8x512xbf16>,
    %c0_59 = arith.constant 0 : index
    %c33_60 = arith.constant 33 : index
    %44 = vector.load %arg8[%c0_59, %c33_60] : memref<8x640xbf16, #tpu.memory_space<vmem>>, vector<8x512xbf16>
    %c56_61 = arith.constant 56 : index
    %c0_62 = arith.constant 0 : index
    %45 = vector.load %arg7[%c56_61, %c0_62] : memref<72x512xbf16, #tpu.memory_space<vmem>>, vector<8x512xbf16>
    tpu.vector_store %arg7[%c56_61, %c0_62], %44 {strides = array<i32>} : memref<72x512xbf16, #tpu.memory_space<vmem>>, vector<8x512xbf16>,
    %c0_63 = arith.constant 0 : index
    %c34_64 = arith.constant 34 : index
    %46 = vector.load %arg8[%c0_63, %c34_64] : memref<8x640xbf16, #tpu.memory_space<vmem>>, vector<8x512xbf16>
    %c64_65 = arith.constant 64 : index
    %c0_66 = arith.constant 0 : index
    %47 = vector.load %arg7[%c64_65, %c0_66] : memref<72x512xbf16, #tpu.memory_space<vmem>>, vector<8x512xbf16>
    tpu.vector_store %arg7[%c64_65, %c0_66], %46 {strides = array<i32>} : memref<72x512xbf16, #tpu.memory_space<vmem>>, vector<8x512xbf16>,
    %c1_67 = arith.constant 1 : index
    %c0_68 = arith.constant 0 : index
    %c0_69 = arith.constant 0 : index
    %48 = vector.load %arg2[%c1_67, %c0_68, %c0_69] : memref<2x8x72xbf16, #tpu.memory_space<vmem>>, vector<1x8x72xbf16>
    %49 = vector.shape_cast %48 : vector<1x8x72xbf16> to vector<8x72xbf16>
    %c0_70 = arith.constant 0 : index
    %c0_71 = arith.constant 0 : index
    %50 = vector.load %arg7[%c0_70, %c0_71] : memref<72x512xbf16, #tpu.memory_space<vmem>>, vector<72x512xbf16>
    %cst_72 = arith.constant dense<0.000000e+00> : vector<8x512xf32>
    %51 = tpu.matmul %49, %50, %cst_72 {dimension_numbers = #tpu.dot_dimension_numbers<[1], [0], [0], [1], [0, 0, 1, 1], [], []>} : vector<8x72xbf16>, vector<72x512xbf16>, vector<8x512xf32> -> vector<8x512xf32>
    %c0_73 = arith.constant 0 : index
    %c1_74 = arith.constant 1 : index
    %52 = vector.load %arg3[%c0_73, %c1_74] : memref<8x3xf32, #tpu.memory_space<vmem>>, vector<8x1xf32>
    %53 = vector.broadcast %52 : vector<8x1xf32> to vector<8x512xf32>
    %54 = arith.addf %51, %53 : vector<8x512xf32>
    %55 = math.tanh %54 : vector<8x512xf32>
    %c0_75 = arith.constant 0 : index
    %c0_76 = arith.constant 0 : index
    %c0_77 = arith.constant 0 : index
    %56 = vector.load %arg4[%c0_75, %c0_76, %c0_77] : memref<8x8x512xf32, #tpu.memory_space<vmem>>, vector<1x8x512xf32>
    %57 = vector.shape_cast %56 : vector<1x8x512xf32> to vector<8x512xf32>
    %58 = vector.extract_strided_slice %55 {offsets = [0, 0], sizes = [1, 512], strides = [1, 1]} : vector<8x512xf32> to vector<1x512xf32>
    %59 = vector.broadcast %58 : vector<1x512xf32> to vector<8x512xf32>
    %60 = arith.mulf %57, %59 : vector<8x512xf32>
    %c1_78 = arith.constant 1 : index
    %c0_79 = arith.constant 0 : index
    %c0_80 = arith.constant 0 : index
    %61 = vector.load %arg4[%c1_78, %c0_79, %c0_80] : memref<8x8x512xf32, #tpu.memory_space<vmem>>, vector<1x8x512xf32>
    %62 = vector.shape_cast %61 : vector<1x8x512xf32> to vector<8x512xf32>
    %63 = vector.extract_strided_slice %55 {offsets = [1, 0], sizes = [1, 512], strides = [1, 1]} : vector<8x512xf32> to vector<1x512xf32>
    %64 = vector.broadcast %63 : vector<1x512xf32> to vector<8x512xf32>
    %65 = arith.mulf %62, %64 : vector<8x512xf32>
    %66 = arith.addf %60, %65 : vector<8x512xf32>
    %c2_81 = arith.constant 2 : index
    %c0_82 = arith.constant 0 : index
    %c0_83 = arith.constant 0 : index
    %67 = vector.load %arg4[%c2_81, %c0_82, %c0_83] : memref<8x8x512xf32, #tpu.memory_space<vmem>>, vector<1x8x512xf32>
    %68 = vector.shape_cast %67 : vector<1x8x512xf32> to vector<8x512xf32>
    %69 = vector.extract_strided_slice %55 {offsets = [2, 0], sizes = [1, 512], strides = [1, 1]} : vector<8x512xf32> to vector<1x512xf32>
    %70 = vector.broadcast %69 : vector<1x512xf32> to vector<8x512xf32>
    %71 = arith.mulf %68, %70 : vector<8x512xf32>
    %72 = arith.addf %66, %71 : vector<8x512xf32>
    %c3 = arith.constant 3 : index
    %c0_84 = arith.constant 0 : index
    %c0_85 = arith.constant 0 : index
    %73 = vector.load %arg4[%c3, %c0_84, %c0_85] : memref<8x8x512xf32, #tpu.memory_space<vmem>>, vector<1x8x512xf32>
    %74 = vector.shape_cast %73 : vector<1x8x512xf32> to vector<8x512xf32>
    %75 = vector.extract_strided_slice %55 {offsets = [3, 0], sizes = [1, 512], strides = [1, 1]} : vector<8x512xf32> to vector<1x512xf32>
    %76 = vector.broadcast %75 : vector<1x512xf32> to vector<8x512xf32>
    %77 = arith.mulf %74, %76 : vector<8x512xf32>
    %78 = arith.addf %72, %77 : vector<8x512xf32>
    %c4 = arith.constant 4 : index
    %c0_86 = arith.constant 0 : index
    %c0_87 = arith.constant 0 : index
    %79 = vector.load %arg4[%c4, %c0_86, %c0_87] : memref<8x8x512xf32, #tpu.memory_space<vmem>>, vector<1x8x512xf32>
    %80 = vector.shape_cast %79 : vector<1x8x512xf32> to vector<8x512xf32>
    %81 = vector.extract_strided_slice %55 {offsets = [4, 0], sizes = [1, 512], strides = [1, 1]} : vector<8x512xf32> to vector<1x512xf32>
    %82 = vector.broadcast %81 : vector<1x512xf32> to vector<8x512xf32>
    %83 = arith.mulf %80, %82 : vector<8x512xf32>
    %84 = arith.addf %78, %83 : vector<8x512xf32>
    %c5 = arith.constant 5 : index
    %c0_88 = arith.constant 0 : index
    %c0_89 = arith.constant 0 : index
    %85 = vector.load %arg4[%c5, %c0_88, %c0_89] : memref<8x8x512xf32, #tpu.memory_space<vmem>>, vector<1x8x512xf32>
    %86 = vector.shape_cast %85 : vector<1x8x512xf32> to vector<8x512xf32>
    %87 = vector.extract_strided_slice %55 {offsets = [5, 0], sizes = [1, 512], strides = [1, 1]} : vector<8x512xf32> to vector<1x512xf32>
    %88 = vector.broadcast %87 : vector<1x512xf32> to vector<8x512xf32>
    %89 = arith.mulf %86, %88 : vector<8x512xf32>
    %90 = arith.addf %84, %89 : vector<8x512xf32>
    %c6 = arith.constant 6 : index
    %c0_90 = arith.constant 0 : index
    %c0_91 = arith.constant 0 : index
    %91 = vector.load %arg4[%c6, %c0_90, %c0_91] : memref<8x8x512xf32, #tpu.memory_space<vmem>>, vector<1x8x512xf32>
    %92 = vector.shape_cast %91 : vector<1x8x512xf32> to vector<8x512xf32>
    %93 = vector.extract_strided_slice %55 {offsets = [6, 0], sizes = [1, 512], strides = [1, 1]} : vector<8x512xf32> to vector<1x512xf32>
    %94 = vector.broadcast %93 : vector<1x512xf32> to vector<8x512xf32>
    %95 = arith.mulf %92, %94 : vector<8x512xf32>
    %96 = arith.addf %90, %95 : vector<8x512xf32>
    %c7 = arith.constant 7 : index
    %c0_92 = arith.constant 0 : index
    %c0_93 = arith.constant 0 : index
    %97 = vector.load %arg4[%c7, %c0_92, %c0_93] : memref<8x8x512xf32, #tpu.memory_space<vmem>>, vector<1x8x512xf32>
    %98 = vector.shape_cast %97 : vector<1x8x512xf32> to vector<8x512xf32>
    %99 = vector.extract_strided_slice %55 {offsets = [7, 0], sizes = [1, 512], strides = [1, 1]} : vector<8x512xf32> to vector<1x512xf32>
    %100 = vector.broadcast %99 : vector<1x512xf32> to vector<8x512xf32>
    %101 = arith.mulf %98, %100 : vector<8x512xf32>
    %102 = arith.addf %96, %101 : vector<8x512xf32>
    %c0_94 = arith.constant 0 : index
    %c0_95 = arith.constant 0 : index
    %103 = vector.load %arg5[%c0_94, %c0_95] : memref<512x2xf32, #tpu.memory_space<vmem>>, vector<512x2xf32>
    %cst_96 = arith.constant dense<0.000000e+00> : vector<8x2xf32>
    %104 = tpu.matmul %102, %103, %cst_96 {dimension_numbers = #tpu.dot_dimension_numbers<[1], [0], [0], [1], [0, 0, 1, 1], [], []>} : vector<8x512xf32>, vector<512x2xf32>, vector<8x2xf32> -> vector<8x2xf32>
    %c0_97 = arith.constant 0 : index
    %c2_98 = arith.constant 2 : index
    %105 = vector.load %arg3[%c0_97, %c2_98] : memref<8x3xf32, #tpu.memory_space<vmem>>, vector<8x1xf32>
    %106 = vector.broadcast %105 : vector<8x1xf32> to vector<8x2xf32>
    %107 = arith.addf %104, %106 : vector<8x2xf32>
    %cst_99 = arith.constant dense<0xFF800000> : vector<2xf32>
    %108 = vector.multi_reduction <maximumf>, %107, %cst_99 [0] : vector<8x2xf32> to vector<2xf32>
    %109 = vector.shape_cast %108 : vector<2xf32> to vector<1x2xf32>
    %110 = vector.broadcast %109 : vector<1x2xf32> to vector<8x2xf32>
    %111 = arith.subf %107, %110 : vector<8x2xf32>
    %112 = math.exp %111 : vector<8x2xf32>
    %cst_100 = arith.constant dense<0.000000e+00> : vector<2xf32>
    %113 = vector.multi_reduction <add>, %112, %cst_100 [0] : vector<8x2xf32> to vector<2xf32>
    %114 = vector.shape_cast %113 : vector<2xf32> to vector<1x2xf32>
    %115 = math.log %114 : vector<1x2xf32>
    %116 = arith.addf %109, %115 : vector<1x2xf32>
    %117 = vector.broadcast %116 : vector<1x2xf32> to vector<8x2xf32>
    %118 = arith.subf %107, %117 : vector<8x2xf32>
    %c0_101 = arith.constant 0 : index
    %c0_102 = arith.constant 0 : index
    %119 = vector.load %arg6[%c0_101, %c0_102] : memref<8x2xf32, #tpu.memory_space<vmem>>, vector<8x2xf32>
    tpu.vector_store %arg6[%c0_101, %c0_102], %118 {strides = array<i32>} : memref<8x2xf32, #tpu.memory_space<vmem>>, vector<8x2xf32>,
    return
  }
  func.func @transform_0(%arg0: i32) -> (i32, i32) {
    %c0_i32 = arith.constant 0 : i32
    %c0_i32_0 = arith.constant 0 : i32
    %c0_i32_1 = arith.constant 0 : i32
    return %c0_i32, %c0_i32_0 : i32, i32
  }
  func.func @transform_1(%arg0: i32) -> (i32, i32, i32) {
    %c0_i32 = arith.constant 0 : i32
    %c0_i32_0 = arith.constant 0 : i32
    %c0_i32_1 = arith.constant 0 : i32
    %c0_i32_2 = arith.constant 0 : i32
    return %c0_i32, %c0_i32_0, %c0_i32_1 : i32, i32, i32
  }
  func.func @transform_2(%arg0: i32) -> (i32, i32) {
    %c0_i32 = arith.constant 0 : i32
    %c0_i32_0 = arith.constant 0 : i32
    %c0_i32_1 = arith.constant 0 : i32
    return %c0_i32, %c0_i32_0 : i32, i32
  }
  func.func @transform_3(%arg0: i32) -> (i32, i32, i32) {
    %c0_i32 = arith.constant 0 : i32
    %c0_i32_0 = arith.constant 0 : i32
    %c0_i32_1 = arith.constant 0 : i32
    %c0_i32_2 = arith.constant 0 : i32
    return %c0_i32, %c0_i32_0, %c0_i32_1 : i32, i32, i32
  }
  func.func @transform_4(%arg0: i32) -> (i32, i32) {
    %c0_i32 = arith.constant 0 : i32
    %c0_i32_0 = arith.constant 0 : i32
    %c0_i32_1 = arith.constant 0 : i32
    return %c0_i32, %c0_i32_0 : i32, i32
  }
  func.func @transform_5(%arg0: i32) -> (i32, i32) {
    %c0_i32 = arith.constant 0 : i32
    %c0_i32_0 = arith.constant 0 : i32
    %c0_i32_1 = arith.constant 0 : i32
    return %c0_i32, %c0_i32_0 : i32, i32
  }
}

</mosaic_0001>

<llo_original>
// kernel: _lambda_.1
$region0: #{_lambda_.1}
  #allocation0 [shape = 'u32[]', space=smem, size = 0x4, offset = 0x4, fixed_abs, tag = 'smem constant byte address 0x4 - core index']
  #allocation1 [shape = 'u32[144,128]{1,0:T(1,128)}', space=vmem, size = 0x12000, scoped, tag = 'internal scratch']
  #allocation2 [shape = 'bf16[72,512]{1,0:T(8,128)(2,1)}', space=vmem, size = 0x12000, scoped, tag = 'scratch operand']
  #allocation3 [shape = 'bf16[8,640]{1,0:T(8,128)(2,1)}', space=vmem, size = 0x2800, scoped, tag = 'scratch operand']
  %s0 = inlined_call_operand.vmem [shape: bf16[8,640], index: 0, kind: input, shape index: {}]
  %s1 = inlined_call_operand.vmem [shape: bf16[2,8,72], index: 1, kind: input, shape index: {}]
  %s2 = inlined_call_operand.vmem [shape: f32[8,3], index: 2, kind: input, shape index: {}]
  %s3 = inlined_call_operand.vmem [shape: f32[8,8,512], index: 3, kind: input, shape index: {}]
  %s4 = inlined_call_operand.hbm [shape: f32[512,2], index: 4, kind: input, shape index: {}]
  %s5 = inlined_call_operand.vmem [shape: f32[8,2], index: 5, kind: output, shape index: {}]
  %s6 = sld [smem:[#allocation0]]
  $region34: #{_lambda_.1} parent=0
    _
  %s8 = ssub.s32 1, %s6
  %s9 = scalar_select 0, %s8, %s6
  $region1: #{_lambda_.1} parent=0
    #allocation4 [shape = 'u8[262144]{0}', space=vmem, size = 0x40000, scoped, tag = 'input window, operand 4, single buffered']
    #allocation5 [shape = 's32[1]{0}', space=sflag, size = 0x4, scoped, tag = 'scoped memory for _lambda_.1']
    %10 = vsyncpa [#allocation5], 0
    // Predicated region
    $region2: #{_lambda_.1} parent=1 // pred_check
      _
    $region3: #{_lambda_.1} parent=1 // pred_check_branch
      %12 = sbr.rel (0) target = $region5
    $region4: #{_lambda_.1} parent=1 // pred_region
      _
    $region5: #{_lambda_.1} parent=1 // pred_fallthru
      _
    // Predicated region
    $region6: #{_lambda_.1} parent=1 // pred_check
      _
    $region7: #{_lambda_.1} parent=1 // pred_check_branch
      %14 = sbr.rel (0) target = $region9
    $region8: #{_lambda_.1} parent=1 // pred_region
      _
    $region9: #{_lambda_.1} parent=1 // pred_fallthru
      _
    // Predicated region
    $region10: #{_lambda_.1} parent=1 // pred_check
      _
    $region11: #{_lambda_.1} parent=1 // pred_check_branch
      %16 = sbr.rel (0) target = $region13
    $region12: #{_lambda_.1} parent=1 // pred_region
      _
    $region13: #{_lambda_.1} parent=1 // pred_fallthru
      _
    // Predicated region
    $region14: #{_lambda_.1} parent=1 // pred_check
      _
    $region15: #{_lambda_.1} parent=1 // pred_check_branch
      %18 = sbr.rel (0) target = $region17
    $region16: #{_lambda_.1} parent=1 // pred_region
      _
    $region17: #{_lambda_.1} parent=1 // pred_fallthru
      _
    // Predicated region
    $region18: #{_lambda_.1} parent=1 // pred_check
      _
    $region19: #{_lambda_.1} parent=1 // pred_check_branch
      %20 = sbr.rel (0) target = $region21
    $region20: #{_lambda_.1} parent=1 // pred_region
      %s22 = ssub.s32 8192, 8192
      %23 = vsyncadd [#allocation5], %s22
      %s24 = sshll.u32 [#allocation4], 4
      %s25 = int_to_ptr.vmem [resolvable:$true] %s24
      %30 = dma.hbm_to_vmem [thread:$0]  %s4, 8192, %s25, [#allocation5], 128, 128, 8
    $region21: #{_lambda_.1} parent=1 // pred_fallthru
      _
    // Predicated region
    $region22: #{_lambda_.1} parent=1 // pred_check
      _
    $region23: #{_lambda_.1} parent=1 // pred_check_branch
      %32 = sbr.rel (0) target = $region25
    $region24: #{_lambda_.1} parent=1 // pred_region
      %33 = dma.done [#allocation5], 8192
    $region25: #{_lambda_.1} parent=1 // pred_fallthru
      _
    %v35 = vld [vmem:[%s0] sm:$0xff]
    %v36 = vld [vmem:[%s0 + $0x8] sm:$0xff]
    %37 = vst [vmem:[#allocation2] sm:$0xff] %v35
    %38 = vst [vmem:[#allocation2 + $0x8] sm:$0xff] %v36
    %v39 = vld [vmem:[%s0] sm:$0xff]
    %v40 = vld [vmem:[%s0 + $0x8] sm:$0xff]
    %v41 = vld [vmem:[%s0 + $0x10] sm:$0xf]
    %45 = vrot.lane.b32.xlu0 %v39, 127
    %v46 = vpop.permute.xlu0 %45
    %47 = vrot.lane.b32.xlu0 %v40, 127
    %v48 = vpop.permute.xlu0 %47
    %49 = vrot.lane.b32.xlu0 %v41, 127
    %v50 = vpop.permute.xlu0 %49
    %v51 = vrot.slane %v46, 4
    %v52 = vrot.slane %v48, 4
    %v53 = vrot.slane %v50, 4
    %vm54 = vcmask 1043456
    %v55 = vsel %vm54, %v51, %v52
    %vm56 = vcmask 1039360
    %v57 = vsel %vm56, %v46, %v55
    %v58 = vsel %vm54, %v52, %v53
    %v59 = vsel %vm56, %v48, %v58
    %62 = vst [vmem:[#allocation2 + $0x10] sm:$0xff] %v57
    %63 = vst [vmem:[#allocation2 + $0x18] sm:$0xff] %v59
    %v64 = vld [vmem:[%s0] sm:$0xff]
    %v65 = vld [vmem:[%s0 + $0x8] sm:$0xff]
    %v66 = vld [vmem:[%s0 + $0x10] sm:$0xf]
    %70 = vrot.lane.b32.xlu0 %v64, 126
    %v71 = vpop.permute.xlu0 %70
    %72 = vrot.lane.b32.xlu0 %v65, 126
    %v73 = vpop.permute.xlu0 %72
    %74 = vrot.lane.b32.xlu0 %v66, 126
    %v75 = vpop.permute.xlu0 %74
    %v76 = vrot.slane %v71, 4
    %v77 = vrot.slane %v73, 4
    %v78 = vrot.slane %v75, 4
    %v79 = vsel %vm54, %v76, %v77
    %vm80 = vcmask 1031168
    %v81 = vsel %vm80, %v71, %v79
    %v82 = vsel %vm54, %v77, %v78
    %v83 = vsel %vm80, %v73, %v82
    %86 = vst [vmem:[#allocation2 + $0x20] sm:$0xff] %v81
    %87 = vst [vmem:[#allocation2 + $0x28] sm:$0xff] %v83
    %v88 = vld [vmem:[%s0] sm:$0xff]
    %v89 = vld [vmem:[%s0 + $0x8] sm:$0xff]
    %v90 = vld [vmem:[%s0 + $0x10] sm:$0xf]
    %94 = vrot.lane.b32.xlu0 %v88, 112
    %v95 = vpop.permute.xlu0 %94
    %96 = vrot.lane.b32.xlu0 %v89, 112
    %v97 = vpop.permute.xlu0 %96
    %98 = vrot.lane.b32.xlu0 %v90, 112
    %v99 = vpop.permute.xlu0 %98
    %v100 = vrot.slane %v95, 4
    %v101 = vrot.slane %v97, 4
    %v102 = vrot.slane %v99, 4
    %v103 = vsel %vm54, %v100, %v101
    %vm104 = vcmask 916480
    %v105 = vsel %vm104, %v95, %v103
    %v106 = vsel %vm54, %v101, %v102
    %v107 = vsel %vm104, %v97, %v106
    %110 = vst [vmem:[#allocation2 + $0x30] sm:$0xff] %v105
    %111 = vst [vmem:[#allocation2 + $0x38] sm:$0xff] %v107
    %v112 = vld [vmem:[%s0] sm:$0xff]
    %v113 = vld [vmem:[%s0 + $0x8] sm:$0xff]
    %v114 = vld [vmem:[%s0 + $0x10] sm:$0xf]
    %118 = vrot.lane.b32.xlu0 %v112, 111
    %v119 = vpop.permute.xlu0 %118
    %120 = vrot.lane.b32.xlu0 %v113, 111
    %v121 = vpop.permute.xlu0 %120
    %122 = vrot.lane.b32.xlu0 %v114, 111
    %v123 = vpop.permute.xlu0 %122
    %v124 = vrot.slane %v119, 4
    %v125 = vrot.slane %v121, 4
    %v126 = vrot.slane %v123, 4
    %v127 = vsel %vm54, %v124, %v125
    %vm128 = vcmask 908288
    %v129 = vsel %vm128, %v119, %v127
    %v130 = vsel %vm54, %v125, %v126
    %v131 = vsel %vm128, %v121, %v130
    %134 = vst [vmem:[#allocation2 + $0x40] sm:$0xff] %v129
    %135 = vst [vmem:[#allocation2 + $0x48] sm:$0xff] %v131
    %v136 = vld [vmem:[%s0] sm:$0xff]
    %v137 = vld [vmem:[%s0 + $0x8] sm:$0xff]
    %v138 = vld [vmem:[%s0 + $0x10] sm:$0xf]
    %142 = vrot.lane.b32.xlu0 %v136, 110
    %v143 = vpop.permute.xlu0 %142
    %144 = vrot.lane.b32.xlu0 %v137, 110
    %v145 = vpop.permute.xlu0 %144
    %146 = vrot.lane.b32.xlu0 %v138, 110
    %v147 = vpop.permute.xlu0 %146
    %v148 = vrot.slane %v143, 4
    %v149 = vrot.slane %v145, 4
    %v150 = vrot.slane %v147, 4
    %v151 = vsel %vm54, %v148, %v149
    %vm152 = vcmask 900096
    %v153 = vsel %vm152, %v143, %v151
    %v154 = vsel %vm54, %v149, %v150
    %v155 = vsel %vm152, %v145, %v154
    %158 = vst [vmem:[#allocation2 + $0x50] sm:$0xff] %v153
    %159 = vst [vmem:[#allocation2 + $0x58] sm:$0xff] %v155
    %v160 = vld [vmem:[%s0] sm:$0xff]
    %v161 = vld [vmem:[%s0 + $0x8] sm:$0xff]
    %v162 = vld [vmem:[%s0 + $0x10] sm:$0xf]
    %166 = vrot.lane.b32.xlu0 %v160, 96
    %v167 = vpop.permute.xlu0 %166
    %168 = vrot.lane.b32.xlu0 %v161, 96
    %v169 = vpop.permute.xlu0 %168
    %170 = vrot.lane.b32.xlu0 %v162, 96
    %v171 = vpop.permute.xlu0 %170
    %v172 = vrot.slane %v167, 4
    %v173 = vrot.slane %v169, 4
    %v174 = vrot.slane %v171, 4
    %v175 = vsel %vm54, %v172, %v173
    %vm176 = vcmask 785408
    %v177 = vsel %vm176, %v167, %v175
    %v178 = vsel %vm54, %v173, %v174
    %v179 = vsel %vm176, %v169, %v178
    %182 = vst [vmem:[#allocation2 + $0x60] sm:$0xff] %v177
    %183 = vst [vmem:[#allocation2 + $0x68] sm:$0xff] %v179
    %v184 = vld [vmem:[%s0] sm:$0xff]
    %v185 = vld [vmem:[%s0 + $0x8] sm:$0xff]
    %v186 = vld [vmem:[%s0 + $0x10] sm:$0xf]
    %190 = vrot.lane.b32.xlu0 %v184, 95
    %v191 = vpop.permute.xlu0 %190
    %192 = vrot.lane.b32.xlu0 %v185, 95
    %v193 = vpop.permute.xlu0 %192
    %194 = vrot.lane.b32.xlu0 %v186, 95
    %v195 = vpop.permute.xlu0 %194
    %v196 = vrot.slane %v191, 4
    %v197 = vrot.slane %v193, 4
    %v198 = vrot.slane %v195, 4
    %v199 = vsel %vm54, %v196, %v197
    %vm200 = vcmask 777216
    %v201 = vsel %vm200, %v191, %v199
    %v202 = vsel %vm54, %v197, %v198
    %v203 = vsel %vm200, %v193, %v202
    %206 = vst [vmem:[#allocation2 + $0x70] sm:$0xff] %v201
    %207 = vst [vmem:[#allocation2 + $0x78] sm:$0xff] %v203
    %v208 = vld [vmem:[%s0] sm:$0xff]
    %v209 = vld [vmem:[%s0 + $0x8] sm:$0xff]
    %v210 = vld [vmem:[%s0 + $0x10] sm:$0xf]
    %214 = vrot.lane.b32.xlu0 %v208, 94
    %v215 = vpop.permute.xlu0 %214
    %216 = vrot.lane.b32.xlu0 %v209, 94
    %v217 = vpop.permute.xlu0 %216
    %218 = vrot.lane.b32.xlu0 %v210, 94
    %v219 = vpop.permute.xlu0 %218
    %v220 = vrot.slane %v215, 4
    %v221 = vrot.slane %v217, 4
    %v222 = vrot.slane %v219, 4
    %v223 = vsel %vm54, %v220, %v221
    %vm224 = vcmask 769024
    %v225 = vsel %vm224, %v215, %v223
    %v226 = vsel %vm54, %v221, %v222
    %v227 = vsel %vm224, %v217, %v226
    %230 = vst [vmem:[#allocation2 + $0x80] sm:$0xff] %v225
    %231 = vst [vmem:[#allocation2 + $0x88] sm:$0xff] %v227
    %v232 = vld [vmem:[%s1] sm:$0xf]
    %v233 = vld [vmem:[#allocation2] sm:$0xff]
    %v234 = vld [vmem:[#allocation2 + $0x8] sm:$0xff]
    %v235 = vld [vmem:[#allocation2 + $0x10] sm:$0xff]
    %v236 = vld [vmem:[#allocation2 + $0x18] sm:$0xff]
    %v237 = vld [vmem:[#allocation2 + $0x20] sm:$0xff]
    %v238 = vld [vmem:[#allocation2 + $0x28] sm:$0xff]
    %v239 = vld [vmem:[#allocation2 + $0x30] sm:$0xff]
    %v240 = vld [vmem:[#allocation2 + $0x38] sm:$0xff]
    %v241 = vld [vmem:[#allocation2 + $0x40] sm:$0xff]
    %v242 = vld [vmem:[#allocation2 + $0x48] sm:$0xff]
    %v243 = vld [vmem:[#allocation2 + $0x50] sm:$0xff]
    %v244 = vld [vmem:[#allocation2 + $0x58] sm:$0xff]
    %v245 = vld [vmem:[#allocation2 + $0x60] sm:$0xff]
    %v246 = vld [vmem:[#allocation2 + $0x68] sm:$0xff]
    %v247 = vld [vmem:[#allocation2 + $0x70] sm:$0xff]
    %v248 = vld [vmem:[#allocation2 + $0x78] sm:$0xff]
    %v249 = vld [vmem:[#allocation2 + $0x80] sm:$0xff]
    %v250 = vld [vmem:[#allocation2 + $0x88] sm:$0xff]
    %v251 = vld [vmem:[%s2] sm:$0xff]
    %253 = vset.pattern.permute.xlu0 0
    %254 = vperm.xlu0 %253, %v251
    %v255 = vpop.permute.xlu0 %254
    %v275 = vunpack.c.l.b16 %v233
    %v276 = vunpack.c.h.b16 %v233
    %v277 = vunpack.c.l.b16 %v234
    %v278 = vunpack.c.h.b16 %v234
    %v279 = vunpack.c.l.b16 %v235
    %v280 = vunpack.c.h.b16 %v235
    %v281 = vunpack.c.l.b16 %v236
    %v282 = vunpack.c.h.b16 %v236
    %v283 = vunpack.c.l.b16 %v237
    %v284 = vunpack.c.h.b16 %v237
    %v285 = vunpack.c.l.b16 %v238
    %v286 = vunpack.c.h.b16 %v238
    %v287 = vunpack.c.l.b16 %v239
    %v288 = vunpack.c.h.b16 %v239
    %v289 = vunpack.c.l.b16 %v240
    %v290 = vunpack.c.h.b16 %v240
    %v291 = vunpack.c.l.b16 %v241
    %v292 = vunpack.c.h.b16 %v241
    %v293 = vunpack.c.l.b16 %v242
    %v294 = vunpack.c.h.b16 %v242
    %v295 = vunpack.c.l.b16 %v243
    %v296 = vunpack.c.h.b16 %v243
    %v297 = vunpack.c.l.b16 %v244
    %v298 = vunpack.c.h.b16 %v244
    %v299 = vunpack.c.l.b16 %v245
    %v300 = vunpack.c.h.b16 %v245
    %v301 = vunpack.c.l.b16 %v246
    %v302 = vunpack.c.h.b16 %v246
    %v303 = vunpack.c.l.b16 %v247
    %v304 = vunpack.c.h.b16 %v247
    %v305 = vunpack.c.l.b16 %v248
    %v306 = vunpack.c.h.b16 %v248
    %v307 = vunpack.c.l.b16 %v249
    %v308 = vunpack.c.h.b16 %v249
    %v309 = vunpack.c.l.b16 %v250
    %v310 = vunpack.c.h.b16 %v250
    %v311 = vpack.c.b16 %v279, %v275
    %v312 = vpack.c.b16 %v280, %v276
    %v313 = vpack.c.b16 %v281, %v277
    %v314 = vpack.c.b16 %v282, %v278
    %v315 = vpack.c.b16 %v287, %v283
    %v316 = vpack.c.b16 %v288, %v284
    %v317 = vpack.c.b16 %v289, %v285
    %v318 = vpack.c.b16 %v290, %v286
    %v319 = vpack.c.b16 %v295, %v291
    %v320 = vpack.c.b16 %v296, %v292
    %v321 = vpack.c.b16 %v297, %v293
    %v322 = vpack.c.b16 %v298, %v294
    %v323 = vpack.c.b16 %v303, %v299
    %v324 = vpack.c.b16 %v304, %v300
    %v325 = vpack.c.b16 %v305, %v301
    %v326 = vpack.c.b16 %v306, %v302
    %v327 = vpack.c.b16 %v307, %v307
    %v328 = vpack.c.b16 %v308, %v308
    %v329 = vpack.c.b16 %v309, %v309
    %v330 = vpack.c.b16 %v310, %v310
    %vm347 = vcmask 588800
    %v349 = vsel %vm347, %v232, 0
    %vm351 = vcmask 1043456
    %v353 = vsel %vm351, %v327, 0
    %v356 = vsel %vm351, %v328, 0
    %v359 = vsel %vm351, %v329, 0
    %v362 = vsel %vm351, %v330, 0
    %364 = vmatprep.subr.bf16.mxu0 %v312
    %365 = vmatpush1.bf16.msra.mxu0 %v311
    %366 = vmatprep.subr.bf16.mxu0 %v316
    %367 = vmatpush1.bf16.msra.mxu0 %v315
    %368 = vmatprep.subr.bf16.mxu0 %v320
    %369 = vmatpush1.bf16.msra.mxu0 %v319
    %370 = vmatprep.subr.bf16.mxu0 %v324
    %371 = vmatpush1.bf16.msra.mxu0 %v323
    %372 = vmatprep.subr.bf16.mxu0 %v356
    %373 = vmatpush1.bf16.msra.mxu0 %v353
    %374 = vmatprep.subr.bf16.mxu0 0
    %375 = vmatpush1.bf16.msra.mxu0 0
    %376 = vmatprep.subr.bf16.mxu0 0
    %377 = vmatpush1.bf16.msra.mxu0 0
    %378 = vmatprep.subr.bf16.mxu0 0
    %379 = vmatpush1.bf16.msra.mxu0 0
    %380 = vmatprep.subr.bf16.mxu0 0
    %381 = vmatpush1.bf16.msra.mxu0 0
    %382 = vmatprep.subr.bf16.mxu0 0
    %383 = vmatpush1.bf16.msra.mxu0 0
    %384 = vmatprep.subr.bf16.mxu0 0
    %385 = vmatpush1.bf16.msra.mxu0 0
    %386 = vmatprep.subr.bf16.mxu0 0
    %387 = vmatpush1.bf16.msra.mxu0 0
    %388 = vmatprep.subr.bf16.mxu0 0
    %389 = vmatpush1.bf16.msra.mxu0 0
    %390 = vmatprep.subr.bf16.mxu0 0
    %391 = vmatpush1.bf16.msra.mxu0 0
    %392 = vmatprep.subr.bf16.mxu0 0
    %393 = vmatpush1.bf16.msra.mxu0 0
    %394 = vmatprep.subr.bf16.mxu0 0
    %395 = vmatpush1.bf16.msra.mxu0 0
    %396 = vmatprep.mubr.bf16.mxu0 0
    %397 = vmatmul.mubr.bf16.gmra.mrb[0].mxu0 %v349
    %v398 = vpop.f32.mrb[0].mxu0
    %v399 = vadd.f32 %v255, %v398
    %v400 = vpop.f32.mrb[0].mxu0
    %v401 = vadd.f32 %v255, %v400
    %v402 = vpop.f32.mrb[0].mxu0
    %v403 = vpop.f32.mrb[0].mxu0
    %404 = vdwg.mxu0
    %405 = vmatprep.subr.bf16.mxu0 %v314
    %406 = vmatpush1.bf16.msra.mxu0 %v313
    %407 = vmatprep.subr.bf16.mxu0 %v318
    %408 = vmatpush1.bf16.msra.mxu0 %v317
    %409 = vmatprep.subr.bf16.mxu0 %v322
    %410 = vmatpush1.bf16.msra.mxu0 %v321
    %411 = vmatprep.subr.bf16.mxu0 %v326
    %412 = vmatpush1.bf16.msra.mxu0 %v325
    %413 = vmatprep.subr.bf16.mxu0 %v362
    %414 = vmatpush1.bf16.msra.mxu0 %v359
    %415 = vmatprep.subr.bf16.mxu0 0
    %416 = vmatpush1.bf16.msra.mxu0 0
    %417 = vmatprep.subr.bf16.mxu0 0
    %418 = vmatpush1.bf16.msra.mxu0 0
    %419 = vmatprep.subr.bf16.mxu0 0
    %420 = vmatpush1.bf16.msra.mxu0 0
    %421 = vmatprep.subr.bf16.mxu0 0
    %422 = vmatpush1.bf16.msra.mxu0 0
    %423 = vmatprep.subr.bf16.mxu0 0
    %424 = vmatpush1.bf16.msra.mxu0 0
    %425 = vmatprep.subr.bf16.mxu0 0
    %426 = vmatpush1.bf16.msra.mxu0 0
    %427 = vmatprep.subr.bf16.mxu0 0
    %428 = vmatpush1.bf16.msra.mxu0 0
    %429 = vmatprep.subr.bf16.mxu0 0
    %430 = vmatpush1.bf16.msra.mxu0 0
    %431 = vmatprep.subr.bf16.mxu0 0
    %432 = vmatpush1.bf16.msra.mxu0 0
    %433 = vmatprep.subr.bf16.mxu0 0
    %434 = vmatpush1.bf16.msra.mxu0 0
    %435 = vmatprep.subr.bf16.mxu0 0
    %436 = vmatpush1.bf16.msra.mxu0 0
    %437 = vmatprep.mubr.bf16.mxu0 0
    %438 = vmatmul.mubr.bf16.gmra.mrb[0].mxu0 %v349
    %v439 = vpop.f32.mrb[0].mxu0
    %v440 = vadd.f32 %v255, %v439
    %v441 = vpop.f32.mrb[0].mxu0
    %v442 = vadd.f32 %v255, %v441
    %v443 = vpop.f32.mrb[0].mxu0
    %v444 = vpop.f32.mrb[0].mxu0
    %445 = vdwg.mxu0
    %v446 = vtanh.pop %v399
    %v447 = vtanh.pop %v401
    %v448 = vtanh.pop %v440
    %v449 = vtanh.pop %v442
    %v450 = vpack.c.bf16 %v446, %v446
    %v451 = vpack.c.bf16 %v447, %v447
    %v452 = vpack.c.bf16 %v448, %v448
    %v453 = vpack.c.bf16 %v449, %v449
    %v459 = vunpack.c.l.b16 %v450
    %v460 = vunpack.c.l.b16 %v451
    %v461 = vunpack.c.l.b16 %v452
    %v462 = vunpack.c.l.b16 %v453
    %v463 = vunpack.c.l.b16 0
    %v464 = vpack.c.b16 %v460, %v459
    %v465 = vpack.c.b16 %v462, %v461
    %v466 = vpack.c.b16 %v463, %v463
    %470 = vst [vmem:[#allocation3] sm:$0xff] %v464
    %471 = vst [vmem:[#allocation3 + $0x8] sm:$0xff] %v465
    %472 = vst [vmem:[#allocation3 + $0x10] sm:$0xf] %v466
    %v473 = vld [vmem:[#allocation3] sm:$0xff]
    %v474 = vld [vmem:[#allocation3 + $0x8] sm:$0xff]
    %475 = vst [vmem:[#allocation2] sm:$0xff] %v473
    %476 = vst [vmem:[#allocation2 + $0x8] sm:$0xff] %v474
    %v477 = vld [vmem:[#allocation3] sm:$0xff]
    %v478 = vld [vmem:[#allocation3 + $0x8] sm:$0xff]
    %v479 = vld [vmem:[#allocation3 + $0x10] sm:$0xf]
    %483 = vrot.lane.b32.xlu0 %v477, 127
    %v484 = vpop.permute.xlu0 %483
    %485 = vrot.lane.b32.xlu0 %v478, 127
    %v486 = vpop.permute.xlu0 %485
    %487 = vrot.lane.b32.xlu0 %v479, 127
    %v488 = vpop.permute.xlu0 %487
    %v489 = vrot.slane %v484, 4
    %v490 = vrot.slane %v486, 4
    %v491 = vrot.slane %v488, 4
    %v492 = vsel %vm54, %v489, %v490
    %v493 = vsel %vm56, %v484, %v492
    %v494 = vsel %vm54, %v490, %v491
    %v495 = vsel %vm56, %v486, %v494
    %498 = vst [vmem:[#allocation2 + $0x10] sm:$0xff] %v493
    %499 = vst [vmem:[#allocation2 + $0x18] sm:$0xff] %v495
    %v500 = vld [vmem:[#allocation3] sm:$0xff]
    %v501 = vld [vmem:[#allocation3 + $0x8] sm:$0xff]
    %v502 = vld [vmem:[#allocation3 + $0x10] sm:$0xf]
    %506 = vrot.lane.b32.xlu0 %v500, 126
    %v507 = vpop.permute.xlu0 %506
    %508 = vrot.lane.b32.xlu0 %v501, 126
    %v509 = vpop.permute.xlu0 %508
    %510 = vrot.lane.b32.xlu0 %v502, 126
    %v511 = vpop.permute.xlu0 %510
    %v512 = vrot.slane %v507, 4
    %v513 = vrot.slane %v509, 4
    %v514 = vrot.slane %v511, 4
    %v515 = vsel %vm54, %v512, %v513
    %v516 = vsel %vm80, %v507, %v515
    %v517 = vsel %vm54, %v513, %v514
    %v518 = vsel %vm80, %v509, %v517
    %521 = vst [vmem:[#allocation2 + $0x20] sm:$0xff] %v516
    %522 = vst [vmem:[#allocation2 + $0x28] sm:$0xff] %v518
    %v523 = vld [vmem:[#allocation3] sm:$0xff]
    %v524 = vld [vmem:[#allocation3 + $0x8] sm:$0xff]
    %v525 = vld [vmem:[#allocation3 + $0x10] sm:$0xf]
    %529 = vrot.lane.b32.xlu0 %v523, 112
    %v530 = vpop.permute.xlu0 %529
    %531 = vrot.lane.b32.xlu0 %v524, 112
    %v532 = vpop.permute.xlu0 %531
    %533 = vrot.lane.b32.xlu0 %v525, 112
    %v534 = vpop.permute.xlu0 %533
    %v535 = vrot.slane %v530, 4
    %v536 = vrot.slane %v532, 4
    %v537 = vrot.slane %v534, 4
    %v538 = vsel %vm54, %v535, %v536
    %v539 = vsel %vm104, %v530, %v538
    %v540 = vsel %vm54, %v536, %v537
    %v541 = vsel %vm104, %v532, %v540
    %544 = vst [vmem:[#allocation2 + $0x30] sm:$0xff] %v539
    %545 = vst [vmem:[#allocation2 + $0x38] sm:$0xff] %v541
    %v546 = vld [vmem:[#allocation3] sm:$0xff]
    %v547 = vld [vmem:[#allocation3 + $0x8] sm:$0xff]
    %v548 = vld [vmem:[#allocation3 + $0x10] sm:$0xf]
    %552 = vrot.lane.b32.xlu0 %v546, 111
    %v553 = vpop.permute.xlu0 %552
    %554 = vrot.lane.b32.xlu0 %v547, 111
    %v555 = vpop.permute.xlu0 %554
    %556 = vrot.lane.b32.xlu0 %v548, 111
    %v557 = vpop.permute.xlu0 %556
    %v558 = vrot.slane %v553, 4
    %v559 = vrot.slane %v555, 4
    %v560 = vrot.slane %v557, 4
    %v561 = vsel %vm54, %v558, %v559
    %v562 = vsel %vm128, %v553, %v561
    %v563 = vsel %vm54, %v559, %v560
    %v564 = vsel %vm128, %v555, %v563
    %567 = vst [vmem:[#allocation2 + $0x40] sm:$0xff] %v562
    %568 = vst [vmem:[#allocation2 + $0x48] sm:$0xff] %v564
    %v569 = vld [vmem:[#allocation3] sm:$0xff]
    %v570 = vld [vmem:[#allocation3 + $0x8] sm:$0xff]
    %v571 = vld [vmem:[#allocation3 + $0x10] sm:$0xf]
    %575 = vrot.lane.b32.xlu0 %v569, 110
    %v576 = vpop.permute.xlu0 %575
    %577 = vrot.lane.b32.xlu0 %v570, 110
    %v578 = vpop.permute.xlu0 %577
    %579 = vrot.lane.b32.xlu0 %v571, 110
    %v580 = vpop.permute.xlu0 %579
    %v581 = vrot.slane %v576, 4
    %v582 = vrot.slane %v578, 4
    %v583 = vrot.slane %v580, 4
    %v584 = vsel %vm54, %v581, %v582
    %v585 = vsel %vm152, %v576, %v584
    %v586 = vsel %vm54, %v582, %v583
    %v587 = vsel %vm152, %v578, %v586
    %590 = vst [vmem:[#allocation2 + $0x50] sm:$0xff] %v585
    %591 = vst [vmem:[#allocation2 + $0x58] sm:$0xff] %v587
    %v592 = vld [vmem:[#allocation3] sm:$0xff]
    %v593 = vld [vmem:[#allocation3 + $0x8] sm:$0xff]
    %v594 = vld [vmem:[#allocation3 + $0x10] sm:$0xf]
    %598 = vrot.lane.b32.xlu0 %v592, 96
    %v599 = vpop.permute.xlu0 %598
    %600 = vrot.lane.b32.xlu0 %v593, 96
    %v601 = vpop.permute.xlu0 %600
    %602 = vrot.lane.b32.xlu0 %v594, 96
    %v603 = vpop.permute.xlu0 %602
    %v604 = vrot.slane %v599, 4
    %v605 = vrot.slane %v601, 4
    %v606 = vrot.slane %v603, 4
    %v607 = vsel %vm54, %v604, %v605
    %v608 = vsel %vm176, %v599, %v607
    %v609 = vsel %vm54, %v605, %v606
    %v610 = vsel %vm176, %v601, %v609
    %613 = vst [vmem:[#allocation2 + $0x60] sm:$0xff] %v608
    %614 = vst [vmem:[#allocation2 + $0x68] sm:$0xff] %v610
    %v615 = vld [vmem:[#allocation3] sm:$0xff]
    %v616 = vld [vmem:[#allocation3 + $0x8] sm:$0xff]
    %v617 = vld [vmem:[#allocation3 + $0x10] sm:$0xf]
    %621 = vrot.lane.b32.xlu0 %v615, 95
    %v622 = vpop.permute.xlu0 %621
    %623 = vrot.lane.b32.xlu0 %v616, 95
    %v624 = vpop.permute.xlu0 %623
    %625 = vrot.lane.b32.xlu0 %v617, 95
    %v626 = vpop.permute.xlu0 %625
    %v627 = vrot.slane %v622, 4
    %v628 = vrot.slane %v624, 4
    %v629 = vrot.slane %v626, 4
    %v630 = vsel %vm54, %v627, %v628
    %v631 = vsel %vm200, %v622, %v630
    %v632 = vsel %vm54, %v628, %v629
    %v633 = vsel %vm200, %v624, %v632
    %636 = vst [vmem:[#allocation2 + $0x70] sm:$0xff] %v631
    %637 = vst [vmem:[#allocation2 + $0x78] sm:$0xff] %v633
    %v638 = vld [vmem:[#allocation3] sm:$0xff]
    %v639 = vld [vmem:[#allocation3 + $0x8] sm:$0xff]
    %v640 = vld [vmem:[#allocation3 + $0x10] sm:$0xf]
    %644 = vrot.lane.b32.xlu0 %v638, 94
    %v645 = vpop.permute.xlu0 %644
    %646 = vrot.lane.b32.xlu0 %v639, 94
    %v647 = vpop.permute.xlu0 %646
    %648 = vrot.lane.b32.xlu0 %v640, 94
    %v649 = vpop.permute.xlu0 %648
    %v650 = vrot.slane %v645, 4
    %v651 = vrot.slane %v647, 4
    %v652 = vrot.slane %v649, 4
    %v653 = vsel %vm54, %v650, %v651
    %v654 = vsel %vm224, %v645, %v653
    %v655 = vsel %vm54, %v651, %v652
    %v656 = vsel %vm224, %v647, %v655
    %659 = vst [vmem:[#allocation2 + $0x80] sm:$0xff] %v654
    %660 = vst [vmem:[#allocation2 + $0x88] sm:$0xff] %v656
    %s661 = scalar_lea.vmem %s1, 4
    %v662 = vld [vmem:[%s661] sm:$0xf]
    %v663 = vld [vmem:[#allocation2] sm:$0xff]
    %v664 = vld [vmem:[#allocation2 + $0x8] sm:$0xff]
    %v665 = vld [vmem:[#allocation2 + $0x10] sm:$0xff]
    %v666 = vld [vmem:[#allocation2 + $0x18] sm:$0xff]
    %v667 = vld [vmem:[#allocation2 + $0x20] sm:$0xff]
    %v668 = vld [vmem:[#allocation2 + $0x28] sm:$0xff]
    %v669 = vld [vmem:[#allocation2 + $0x30] sm:$0xff]
    %v670 = vld [vmem:[#allocation2 + $0x38] sm:$0xff]
    %v671 = vld [vmem:[#allocation2 + $0x40] sm:$0xff]
    %v672 = vld [vmem:[#allocation2 + $0x48] sm:$0xff]
    %v673 = vld [vmem:[#allocation2 + $0x50] sm:$0xff]
    %v674 = vld [vmem:[#allocation2 + $0x58] sm:$0xff]
    %v675 = vld [vmem:[#allocation2 + $0x60] sm:$0xff]
    %v676 = vld [vmem:[#allocation2 + $0x68] sm:$0xff]
    %v677 = vld [vmem:[#allocation2 + $0x70] sm:$0xff]
    %v678 = vld [vmem:[#allocation2 + $0x78] sm:$0xff]
    %v679 = vld [vmem:[#allocation2 + $0x80] sm:$0xff]
    %v680 = vld [vmem:[#allocation2 + $0x88] sm:$0xff]
    %v681 = vld [vmem:[%s2] sm:$0xff]
    %683 = vset.pattern.permute.xlu0 1
    %684 = vperm.xlu0 %683, %v681
    %v685 = vpop.permute.xlu0 %684
    %v705 = vunpack.c.l.b16 %v663
    %v706 = vunpack.c.h.b16 %v663
    %v707 = vunpack.c.l.b16 %v664
    %v708 = vunpack.c.h.b16 %v664
    %v709 = vunpack.c.l.b16 %v665
    %v710 = vunpack.c.h.b16 %v665
    %v711 = vunpack.c.l.b16 %v666
    %v712 = vunpack.c.h.b16 %v666
    %v713 = vunpack.c.l.b16 %v667
    %v714 = vunpack.c.h.b16 %v667
    %v715 = vunpack.c.l.b16 %v668
    %v716 = vunpack.c.h.b16 %v668
    %v717 = vunpack.c.l.b16 %v669
    %v718 = vunpack.c.h.b16 %v669
    %v719 = vunpack.c.l.b16 %v670
    %v720 = vunpack.c.h.b16 %v670
    %v721 = vunpack.c.l.b16 %v671
    %v722 = vunpack.c.h.b16 %v671
    %v723 = vunpack.c.l.b16 %v672
    %v724 = vunpack.c.h.b16 %v672
    %v725 = vunpack.c.l.b16 %v673
    %v726 = vunpack.c.h.b16 %v673
    %v727 = vunpack.c.l.b16 %v674
    %v728 = vunpack.c.h.b16 %v674
    %v729 = vunpack.c.l.b16 %v675
    %v730 = vunpack.c.h.b16 %v675
    %v731 = vunpack.c.l.b16 %v676
    %v732 = vunpack.c.h.b16 %v676
    %v733 = vunpack.c.l.b16 %v677
    %v734 = vunpack.c.h.b16 %v677
    %v735 = vunpack.c.l.b16 %v678
    %v736 = vunpack.c.h.b16 %v678
    %v737 = vunpack.c.l.b16 %v679
    %v738 = vunpack.c.h.b16 %v679
    %v739 = vunpack.c.l.b16 %v680
    %v740 = vunpack.c.h.b16 %v680
    %v741 = vpack.c.b16 %v709, %v705
    %v742 = vpack.c.b16 %v710, %v706
    %v743 = vpack.c.b16 %v711, %v707
    %v744 = vpack.c.b16 %v712, %v708
    %v745 = vpack.c.b16 %v717, %v713
    %v746 = vpack.c.b16 %v718, %v714
    %v747 = vpack.c.b16 %v719, %v715
    %v748 = vpack.c.b16 %v720, %v716
    %v749 = vpack.c.b16 %v725, %v721
    %v750 = vpack.c.b16 %v726, %v722
    %v751 = vpack.c.b16 %v727, %v723
    %v752 = vpack.c.b16 %v728, %v724
    %v753 = vpack.c.b16 %v733, %v729
    %v754 = vpack.c.b16 %v734, %v730
    %v755 = vpack.c.b16 %v735, %v731
    %v756 = vpack.c.b16 %v736, %v732
    %v757 = vpack.c.b16 %v737, %v737
    %v758 = vpack.c.b16 %v738, %v738
    %v759 = vpack.c.b16 %v739, %v739
    %v760 = vpack.c.b16 %v740, %v740
    %v778 = vsel %vm347, %v662, 0
    %v781 = vsel %vm351, %v757, 0
    %v784 = vsel %vm351, %v758, 0
    %v787 = vsel %vm351, %v759, 0
    %v790 = vsel %vm351, %v760, 0
    %792 = vmatprep.subr.bf16.mxu0 %v742
    %793 = vmatpush1.bf16.msra.mxu0 %v741
    %794 = vmatprep.subr.bf16.mxu0 %v746
    %795 = vmatpush1.bf16.msra.mxu0 %v745
    %796 = vmatprep.subr.bf16.mxu0 %v750
    %797 = vmatpush1.bf16.msra.mxu0 %v749
    %798 = vmatprep.subr.bf16.mxu0 %v754
    %799 = vmatpush1.bf16.msra.mxu0 %v753
    %800 = vmatprep.subr.bf16.mxu0 %v784
    %801 = vmatpush1.bf16.msra.mxu0 %v781
    %802 = vmatprep.subr.bf16.mxu0 0
    %803 = vmatpush1.bf16.msra.mxu0 0
    %804 = vmatprep.subr.bf16.mxu0 0
    %805 = vmatpush1.bf16.msra.mxu0 0
    %806 = vmatprep.subr.bf16.mxu0 0
    %807 = vmatpush1.bf16.msra.mxu0 0
    %808 = vmatprep.subr.bf16.mxu0 0
    %809 = vmatpush1.bf16.msra.mxu0 0
    %810 = vmatprep.subr.bf16.mxu0 0
    %811 = vmatpush1.bf16.msra.mxu0 0
    %812 = vmatprep.subr.bf16.mxu0 0
    %813 = vmatpush1.bf16.msra.mxu0 0
    %814 = vmatprep.subr.bf16.mxu0 0
    %815 = vmatpush1.bf16.msra.mxu0 0
    %816 = vmatprep.subr.bf16.mxu0 0
    %817 = vmatpush1.bf16.msra.mxu0 0
    %818 = vmatprep.subr.bf16.mxu0 0
    %819 = vmatpush1.bf16.msra.mxu0 0
    %820 = vmatprep.subr.bf16.mxu0 0
    %821 = vmatpush1.bf16.msra.mxu0 0
    %822 = vmatprep.subr.bf16.mxu0 0
    %823 = vmatpush1.bf16.msra.mxu0 0
    %824 = vmatprep.mubr.bf16.mxu0 0
    %825 = vmatmul.mubr.bf16.gmra.mrb[0].mxu0 %v778
    %v826 = vpop.f32.mrb[0].mxu0
    %v827 = vadd.f32 %v685, %v826
    %v828 = vpop.f32.mrb[0].mxu0
    %v829 = vadd.f32 %v685, %v828
    %v830 = vpop.f32.mrb[0].mxu0
    %v831 = vpop.f32.mrb[0].mxu0
    %832 = vdwg.mxu0
    %833 = vmatprep.subr.bf16.mxu0 %v744
    %834 = vmatpush1.bf16.msra.mxu0 %v743
    %835 = vmatprep.subr.bf16.mxu0 %v748
    %836 = vmatpush1.bf16.msra.mxu0 %v747
    %837 = vmatprep.subr.bf16.mxu0 %v752
    %838 = vmatpush1.bf16.msra.mxu0 %v751
    %839 = vmatprep.subr.bf16.mxu0 %v756
    %840 = vmatpush1.bf16.msra.mxu0 %v755
    %841 = vmatprep.subr.bf16.mxu0 %v790
    %842 = vmatpush1.bf16.msra.mxu0 %v787
    %843 = vmatprep.subr.bf16.mxu0 0
    %844 = vmatpush1.bf16.msra.mxu0 0
    %845 = vmatprep.subr.bf16.mxu0 0
    %846 = vmatpush1.bf16.msra.mxu0 0
    %847 = vmatprep.subr.bf16.mxu0 0
    %848 = vmatpush1.bf16.msra.mxu0 0
    %849 = vmatprep.subr.bf16.mxu0 0
    %850 = vmatpush1.bf16.msra.mxu0 0
    %851 = vmatprep.subr.bf16.mxu0 0
    %852 = vmatpush1.bf16.msra.mxu0 0
    %853 = vmatprep.subr.bf16.mxu0 0
    %854 = vmatpush1.bf16.msra.mxu0 0
    %855 = vmatprep.subr.bf16.mxu0 0
    %856 = vmatpush1.bf16.msra.mxu0 0
    %857 = vmatprep.subr.bf16.mxu0 0
    %858 = vmatpush1.bf16.msra.mxu0 0
    %859 = vmatprep.subr.bf16.mxu0 0
    %860 = vmatpush1.bf16.msra.mxu0 0
    %861 = vmatprep.subr.bf16.mxu0 0
    %862 = vmatpush1.bf16.msra.mxu0 0
    %863 = vmatprep.subr.bf16.mxu0 0
    %864 = vmatpush1.bf16.msra.mxu0 0
    %865 = vmatprep.mubr.bf16.mxu0 0
    %866 = vmatmul.mubr.bf16.gmra.mrb[0].mxu0 %v778
    %v867 = vpop.f32.mrb[0].mxu0
    %v868 = vadd.f32 %v685, %v867
    %v869 = vpop.f32.mrb[0].mxu0
    %v870 = vadd.f32 %v685, %v869
    %v871 = vpop.f32.mrb[0].mxu0
    %v872 = vpop.f32.mrb[0].mxu0
    %873 = vdwg.mxu0
    %v874 = vtanh.pop %v827
    %v875 = vtanh.pop %v829
    %v876 = vtanh.pop %v868
    %v877 = vtanh.pop %v870
    %v878 = vld [vmem:[%s3] sm:$0xff]
    %v879 = vld [vmem:[%s3 + $0x8] sm:$0xff]
    %v880 = vld [vmem:[%s3 + $0x10] sm:$0xff]
    %v881 = vld [vmem:[%s3 + $0x18] sm:$0xff]
    %v882 = vlaneseq
    %v883 = vshrl.u32 %v882, 7
    %v884 = vsub.s32 0, %v883
    %v885 = vrot.slane %v874, %v884
    %v886 = vlaneseq
    %v887 = vshrl.u32 %v886, 7
    %v888 = vsub.s32 0, %v887
    %v889 = vrot.slane %v875, %v888
    %v890 = vlaneseq
    %v891 = vshrl.u32 %v890, 7
    %v892 = vsub.s32 0, %v891
    %v893 = vrot.slane %v876, %v892
    %v894 = vlaneseq
    %v895 = vshrl.u32 %v894, 7
    %v896 = vsub.s32 0, %v895
    %v897 = vrot.slane %v877, %v896
    %v898 = vmul.f32 %v878, %v885
    %v899 = vmul.f32 %v879, %v889
    %v900 = vmul.f32 %v880, %v893
    %v901 = vmul.f32 %v881, %v897
    %s902 = scalar_lea.vmem %s3, 32
    %v903 = vld [vmem:[%s902] sm:$0xff]
    %v904 = vld [vmem:[%s902 + $0x8] sm:$0xff]
    %v905 = vld [vmem:[%s902 + $0x10] sm:$0xff]
    %v906 = vld [vmem:[%s902 + $0x18] sm:$0xff]
    %v907 = vlaneseq
    %v908 = vshrl.u32 %v907, 7
    %v909 = vsub.s32 1, %v908
    %v910 = vrot.slane %v874, %v909
    %v911 = vlaneseq
    %v912 = vshrl.u32 %v911, 7
    %v913 = vsub.s32 1, %v912
    %v914 = vrot.slane %v875, %v913
    %v915 = vlaneseq
    %v916 = vshrl.u32 %v915, 7
    %v917 = vsub.s32 1, %v916
    %v918 = vrot.slane %v876, %v917
    %v919 = vlaneseq
    %v920 = vshrl.u32 %v919, 7
    %v921 = vsub.s32 1, %v920
    %v922 = vrot.slane %v877, %v921
    %v923 = vmul.f32 %v903, %v910
    %v924 = vmul.f32 %v904, %v914
    %v925 = vmul.f32 %v905, %v918
    %v926 = vmul.f32 %v906, %v922
    %v927 = vadd.f32 %v898, %v923
    %v928 = vadd.f32 %v899, %v924
    %v929 = vadd.f32 %v900, %v925
    %v930 = vadd.f32 %v901, %v926
    %s931 = scalar_lea.vmem %s3, 64
    %v932 = vld [vmem:[%s931] sm:$0xff]
    %v933 = vld [vmem:[%s931 + $0x8] sm:$0xff]
    %v934 = vld [vmem:[%s931 + $0x10] sm:$0xff]
    %v935 = vld [vmem:[%s931 + $0x18] sm:$0xff]
    %v936 = vlaneseq
    %v937 = vshrl.u32 %v936, 7
    %v938 = vsub.s32 2, %v937
    %v939 = vrot.slane %v874, %v938
    %v940 = vlaneseq
    %v941 = vshrl.u32 %v940, 7
    %v942 = vsub.s32 2, %v941
    %v943 = vrot.slane %v875, %v942
    %v944 = vlaneseq
    %v945 = vshrl.u32 %v944, 7
    %v946 = vsub.s32 2, %v945
    %v947 = vrot.slane %v876, %v946
    %v948 = vlaneseq
    %v949 = vshrl.u32 %v948, 7
    %v950 = vsub.s32 2, %v949
    %v951 = vrot.slane %v877, %v950
    %v952 = vmul.f32 %v932, %v939
    %v953 = vmul.f32 %v933, %v943
    %v954 = vmul.f32 %v934, %v947
    %v955 = vmul.f32 %v935, %v951
    %v956 = vadd.f32 %v927, %v952
    %v957 = vadd.f32 %v928, %v953
    %v958 = vadd.f32 %v929, %v954
    %v959 = vadd.f32 %v930, %v955
    %s960 = scalar_lea.vmem %s3, 96
    %v961 = vld [vmem:[%s960] sm:$0xff]
    %v962 = vld [vmem:[%s960 + $0x8] sm:$0xff]
    %v963 = vld [vmem:[%s960 + $0x10] sm:$0xff]
    %v964 = vld [vmem:[%s960 + $0x18] sm:$0xff]
    %v965 = vlaneseq
    %v966 = vshrl.u32 %v965, 7
    %v967 = vsub.s32 3, %v966
    %v968 = vrot.slane %v874, %v967
    %v969 = vlaneseq
    %v970 = vshrl.u32 %v969, 7
    %v971 = vsub.s32 3, %v970
    %v972 = vrot.slane %v875, %v971
    %v973 = vlaneseq
    %v974 = vshrl.u32 %v973, 7
    %v975 = vsub.s32 3, %v974
    %v976 = vrot.slane %v876, %v975
    %v977 = vlaneseq
    %v978 = vshrl.u32 %v977, 7
    %v979 = vsub.s32 3, %v978
    %v980 = vrot.slane %v877, %v979
    %v981 = vmul.f32 %v961, %v968
    %v982 = vmul.f32 %v962, %v972
    %v983 = vmul.f32 %v963, %v976
    %v984 = vmul.f32 %v964, %v980
    %v985 = vadd.f32 %v956, %v981
    %v986 = vadd.f32 %v957, %v982
    %v987 = vadd.f32 %v958, %v983
    %v988 = vadd.f32 %v959, %v984
    %s989 = scalar_lea.vmem %s3, 128
    %v990 = vld [vmem:[%s989] sm:$0xff]
    %v991 = vld [vmem:[%s989 + $0x8] sm:$0xff]
    %v992 = vld [vmem:[%s989 + $0x10] sm:$0xff]
    %v993 = vld [vmem:[%s989 + $0x18] sm:$0xff]
    %v994 = vlaneseq
    %v995 = vshrl.u32 %v994, 7
    %v996 = vsub.s32 4, %v995
    %v997 = vrot.slane %v874, %v996
    %v998 = vlaneseq
    %v999 = vshrl.u32 %v998, 7
    %v1000 = vsub.s32 4, %v999
    %v1001 = vrot.slane %v875, %v1000
    %v1002 = vlaneseq
    %v1003 = vshrl.u32 %v1002, 7
    %v1004 = vsub.s32 4, %v1003
    %v1005 = vrot.slane %v876, %v1004
    %v1006 = vlaneseq
    %v1007 = vshrl.u32 %v1006, 7
    %v1008 = vsub.s32 4, %v1007
    %v1009 = vrot.slane %v877, %v1008
    %v1010 = vmul.f32 %v990, %v997
    %v1011 = vmul.f32 %v991, %v1001
    %v1012 = vmul.f32 %v992, %v1005
    %v1013 = vmul.f32 %v993, %v1009
    %v1014 = vadd.f32 %v985, %v1010
    %v1015 = vadd.f32 %v986, %v1011
    %v1016 = vadd.f32 %v987, %v1012
    %v1017 = vadd.f32 %v988, %v1013
    %s1018 = scalar_lea.vmem %s3, 160
    %v1019 = vld [vmem:[%s1018] sm:$0xff]
    %v1020 = vld [vmem:[%s1018 + $0x8] sm:$0xff]
    %v1021 = vld [vmem:[%s1018 + $0x10] sm:$0xff]
    %v1022 = vld [vmem:[%s1018 + $0x18] sm:$0xff]
    %v1023 = vlaneseq
    %v1024 = vshrl.u32 %v1023, 7
    %v1025 = vsub.s32 5, %v1024
    %v1026 = vrot.slane %v874, %v1025
    %v1027 = vlaneseq
    %v1028 = vshrl.u32 %v1027, 7
    %v1029 = vsub.s32 5, %v1028
    %v1030 = vrot.slane %v875, %v1029
    %v1031 = vlaneseq
    %v1032 = vshrl.u32 %v1031, 7
    %v1033 = vsub.s32 5, %v1032
    %v1034 = vrot.slane %v876, %v1033
    %v1035 = vlaneseq
    %v1036 = vshrl.u32 %v1035, 7
    %v1037 = vsub.s32 5, %v1036
    %v1038 = vrot.slane %v877, %v1037
    %v1039 = vmul.f32 %v1019, %v1026
    %v1040 = vmul.f32 %v1020, %v1030
    %v1041 = vmul.f32 %v1021, %v1034
    %v1042 = vmul.f32 %v1022, %v1038
    %v1043 = vadd.f32 %v1014, %v1039
    %v1044 = vadd.f32 %v1015, %v1040
    %v1045 = vadd.f32 %v1016, %v1041
    %v1046 = vadd.f32 %v1017, %v1042
    %s1047 = scalar_lea.vmem %s3, 192
    %v1048 = vld [vmem:[%s1047] sm:$0xff]
    %v1049 = vld [vmem:[%s1047 + $0x8] sm:$0xff]
    %v1050 = vld [vmem:[%s1047 + $0x10] sm:$0xff]
    %v1051 = vld [vmem:[%s1047 + $0x18] sm:$0xff]
    %v1052 = vlaneseq
    %v1053 = vshrl.u32 %v1052, 7
    %v1054 = vsub.s32 6, %v1053
    %v1055 = vrot.slane %v874, %v1054
    %v1056 = vlaneseq
    %v1057 = vshrl.u32 %v1056, 7
    %v1058 = vsub.s32 6, %v1057
    %v1059 = vrot.slane %v875, %v1058
    %v1060 = vlaneseq
    %v1061 = vshrl.u32 %v1060, 7
    %v1062 = vsub.s32 6, %v1061
    %v1063 = vrot.slane %v876, %v1062
    %v1064 = vlaneseq
    %v1065 = vshrl.u32 %v1064, 7
    %v1066 = vsub.s32 6, %v1065
    %v1067 = vrot.slane %v877, %v1066
    %v1068 = vmul.f32 %v1048, %v1055
    %v1069 = vmul.f32 %v1049, %v1059
    %v1070 = vmul.f32 %v1050, %v1063
    %v1071 = vmul.f32 %v1051, %v1067
    %v1072 = vadd.f32 %v1043, %v1068
    %v1073 = vadd.f32 %v1044, %v1069
    %v1074 = vadd.f32 %v1045, %v1070
    %v1075 = vadd.f32 %v1046, %v1071
    %s1076 = scalar_lea.vmem %s3, 224
    %v1077 = vld [vmem:[%s1076] sm:$0xff]
    %v1078 = vld [vmem:[%s1076 + $0x8] sm:$0xff]
    %v1079 = vld [vmem:[%s1076 + $0x10] sm:$0xff]
    %v1080 = vld [vmem:[%s1076 + $0x18] sm:$0xff]
    %v1081 = vlaneseq
    %v1082 = vshrl.u32 %v1081, 7
    %v1083 = vsub.s32 7, %v1082
    %v1084 = vrot.slane %v874, %v1083
    %v1085 = vlaneseq
    %v1086 = vshrl.u32 %v1085, 7
    %v1087 = vsub.s32 7, %v1086
    %v1088 = vrot.slane %v875, %v1087
    %v1089 = vlaneseq
    %v1090 = vshrl.u32 %v1089, 7
    %v1091 = vsub.s32 7, %v1090
    %v1092 = vrot.slane %v876, %v1091
    %v1093 = vlaneseq
    %v1094 = vshrl.u32 %v1093, 7
    %v1095 = vsub.s32 7, %v1094
    %v1096 = vrot.slane %v877, %v1095
    %v1097 = vmul.f32 %v1077, %v1084
    %v1098 = vmul.f32 %v1078, %v1088
    %v1099 = vmul.f32 %v1079, %v1092
    %v1100 = vmul.f32 %v1080, %v1096
    %v1101 = vadd.f32 %v1072, %v1097
    %v1102 = vadd.f32 %v1073, %v1098
    %v1103 = vadd.f32 %v1074, %v1099
    %v1104 = vadd.f32 %v1075, %v1100
    %v1105 = vld [vmem:[#allocation4] sm:$0xff]
    %v1106 = vld [vmem:[#allocation4 + $0x8] sm:$0xff]
    %v1107 = vld [vmem:[#allocation4 + $0x10] sm:$0xff]
    %v1108 = vld [vmem:[#allocation4 + $0x18] sm:$0xff]
    %v1109 = vld [vmem:[#allocation4 + $0x20] sm:$0xff]
    %v1110 = vld [vmem:[#allocation4 + $0x28] sm:$0xff]
    %v1111 = vld [vmem:[#allocation4 + $0x30] sm:$0xff]
    %v1112 = vld [vmem:[#allocation4 + $0x38] sm:$0xff]
    %v1113 = vld [vmem:[#allocation4 + $0x40] sm:$0xff]
    %v1114 = vld [vmem:[#allocation4 + $0x48] sm:$0xff]
    %v1115 = vld [vmem:[#allocation4 + $0x50] sm:$0xff]
    %v1116 = vld [vmem:[#allocation4 + $0x58] sm:$0xff]
    %v1117 = vld [vmem:[#allocation4 + $0x60] sm:$0xff]
    %v1118 = vld [vmem:[#allocation4 + $0x68] sm:$0xff]
    %v1119 = vld [vmem:[#allocation4 + $0x70] sm:$0xff]
    %v1120 = vld [vmem:[#allocation4 + $0x78] sm:$0xff]
    %v1121 = vld [vmem:[#allocation4 + $0x80] sm:$0xff]
    %v1122 = vld [vmem:[#allocation4 + $0x88] sm:$0xff]
    %v1123 = vld [vmem:[#allocation4 + $0x90] sm:$0xff]
    %v1124 = vld [vmem:[#allocation4 + $0x98] sm:$0xff]
    %v1125 = vld [vmem:[#allocation4 + $0xa0] sm:$0xff]
    %v1126 = vld [vmem:[#allocation4 + $0xa8] sm:$0xff]
    %v1127 = vld [vmem:[#allocation4 + $0xb0] sm:$0xff]
    %v1128 = vld [vmem:[#allocation4 + $0xb8] sm:$0xff]
    %v1129 = vld [vmem:[#allocation4 + $0xc0] sm:$0xff]
    %v1130 = vld [vmem:[#allocation4 + $0xc8] sm:$0xff]
    %v1131 = vld [vmem:[#allocation4 + $0xd0] sm:$0xff]
    %v1132 = vld [vmem:[#allocation4 + $0xd8] sm:$0xff]
    %v1133 = vld [vmem:[#allocation4 + $0xe0] sm:$0xff]
    %v1134 = vld [vmem:[#allocation4 + $0xe8] sm:$0xff]
    %v1135 = vld [vmem:[#allocation4 + $0xf0] sm:$0xff]
    %v1136 = vld [vmem:[#allocation4 + $0xf8] sm:$0xff]
    %v1137 = vld [vmem:[#allocation4 + $0x100] sm:$0xff]
    %v1138 = vld [vmem:[#allocation4 + $0x108] sm:$0xff]
    %v1139 = vld [vmem:[#allocation4 + $0x110] sm:$0xff]
    %v1140 = vld [vmem:[#allocation4 + $0x118] sm:$0xff]
    %v1141 = vld [vmem:[#allocation4 + $0x120] sm:$0xff]
    %v1142 = vld [vmem:[#allocation4 + $0x128] sm:$0xff]
    %v1143 = vld [vmem:[#allocation4 + $0x130] sm:$0xff]
    %v1144 = vld [vmem:[#allocation4 + $0x138] sm:$0xff]
    %v1145 = vld [vmem:[#allocation4 + $0x140] sm:$0xff]
    %v1146 = vld [vmem:[#allocation4 + $0x148] sm:$0xff]
    %v1147 = vld [vmem:[#allocation4 + $0x150] sm:$0xff]
    %v1148 = vld [vmem:[#allocation4 + $0x158] sm:$0xff]
    %v1149 = vld [vmem:[#allocation4 + $0x160] sm:$0xff]
    %v1150 = vld [vmem:[#allocation4 + $0x168] sm:$0xff]
    %v1151 = vld [vmem:[#allocation4 + $0x170] sm:$0xff]
    %v1152 = vld [vmem:[#allocation4 + $0x178] sm:$0xff]
    %v1153 = vld [vmem:[#allocation4 + $0x180] sm:$0xff]
    %v1154 = vld [vmem:[#allocation4 + $0x188] sm:$0xff]
    %v1155 = vld [vmem:[#allocation4 + $0x190] sm:$0xff]
    %v1156 = vld [vmem:[#allocation4 + $0x198] sm:$0xff]
    %v1157 = vld [vmem:[#allocation4 + $0x1a0] sm:$0xff]
    %v1158 = vld [vmem:[#allocation4 + $0x1a8] sm:$0xff]
    %v1159 = vld [vmem:[#allocation4 + $0x1b0] sm:$0xff]
    %v1160 = vld [vmem:[#allocation4 + $0x1b8] sm:$0xff]
    %v1161 = vld [vmem:[#allocation4 + $0x1c0] sm:$0xff]
    %v1162 = vld [vmem:[#allocation4 + $0x1c8] sm:$0xff]
    %v1163 = vld [vmem:[#allocation4 + $0x1d0] sm:$0xff]
    %v1164 = vld [vmem:[#allocation4 + $0x1d8] sm:$0xff]
    %v1165 = vld [vmem:[#allocation4 + $0x1e0] sm:$0xff]
    %v1166 = vld [vmem:[#allocation4 + $0x1e8] sm:$0xff]
    %v1167 = vld [vmem:[#allocation4 + $0x1f0] sm:$0xff]
    %v1168 = vld [vmem:[#allocation4 + $0x1f8] sm:$0xff]
    %1169 = vset.pattern.permute.xlu0 2
    %1170 = vperm.xlu0 %1169, %v681
    %v1171 = vpop.permute.xlu0 %1170
    %1173 = vmatprep.subr.mxu0 0.0
    %1174 = vmatpush1.msra.mxu0 %v1105
    %1175 = vmatprep.subr.mxu0 0.0
    %1176 = vmatpush1.msra.mxu0 %v1106
    %1177 = vmatprep.subr.mxu0 0.0
    %1178 = vmatpush1.msra.mxu0 %v1107
    %1179 = vmatprep.subr.mxu0 0.0
    %1180 = vmatpush1.msra.mxu0 %v1108
    %1181 = vmatprep.subr.mxu0 0.0
    %1182 = vmatpush1.msra.mxu0 %v1109
    %1183 = vmatprep.subr.mxu0 0.0
    %1184 = vmatpush1.msra.mxu0 %v1110
    %1185 = vmatprep.subr.mxu0 0.0
    %1186 = vmatpush1.msra.mxu0 %v1111
    %1187 = vmatprep.subr.mxu0 0.0
    %1188 = vmatpush1.msra.mxu0 %v1112
    %1189 = vmatprep.subr.mxu0 0.0
    %1190 = vmatpush1.msra.mxu0 %v1113
    %1191 = vmatprep.subr.mxu0 0.0
    %1192 = vmatpush1.msra.mxu0 %v1114
    %1193 = vmatprep.subr.mxu0 0.0
    %1194 = vmatpush1.msra.mxu0 %v1115
    %1195 = vmatprep.subr.mxu0 0.0
    %1196 = vmatpush1.msra.mxu0 %v1116
    %1197 = vmatprep.subr.mxu0 0.0
    %1198 = vmatpush1.msra.mxu0 %v1117
    %1199 = vmatprep.subr.mxu0 0.0
    %1200 = vmatpush1.msra.mxu0 %v1118
    %1201 = vmatprep.subr.mxu0 0.0
    %1202 = vmatpush1.msra.mxu0 %v1119
    %1203 = vmatprep.subr.mxu0 0.0
    %1204 = vmatpush1.msra.mxu0 %v1120
    %1205 = vmatprep.subr.mxu0 0.0
    %1206 = vmatpush1.msra.mxu0 %v1121
    %1207 = vmatprep.subr.mxu0 0.0
    %1208 = vmatpush1.msra.mxu0 %v1122
    %1209 = vmatprep.subr.mxu0 0.0
    %1210 = vmatpush1.msra.mxu0 %v1123
    %1211 = vmatprep.subr.mxu0 0.0
    %1212 = vmatpush1.msra.mxu0 %v1124
    %1213 = vmatprep.subr.mxu0 0.0
    %1214 = vmatpush1.msra.mxu0 %v1125
    %1215 = vmatprep.subr.mxu0 0.0
    %1216 = vmatpush1.msra.mxu0 %v1126
    %1217 = vmatprep.subr.mxu0 0.0
    %1218 = vmatpush1.msra.mxu0 %v1127
    %1219 = vmatprep.subr.mxu0 0.0
    %1220 = vmatpush1.msra.mxu0 %v1128
    %1221 = vmatprep.subr.mxu0 0.0
    %1222 = vmatpush1.msra.mxu0 %v1129
    %1223 = vmatprep.subr.mxu0 0.0
    %1224 = vmatpush1.msra.mxu0 %v1130
    %1225 = vmatprep.subr.mxu0 0.0
    %1226 = vmatpush1.msra.mxu0 %v1131
    %1227 = vmatprep.subr.mxu0 0.0
    %1228 = vmatpush1.msra.mxu0 %v1132
    %1229 = vmatprep.subr.mxu0 0.0
    %1230 = vmatpush1.msra.mxu0 %v1133
    %1231 = vmatprep.subr.mxu0 0.0
    %1232 = vmatpush1.msra.mxu0 %v1134
    %1233 = vmatprep.subr.mxu0 0.0
    %1234 = vmatpush1.msra.mxu0 %v1135
    %1235 = vmatprep.subr.mxu0 0.0
    %1236 = vmatpush1.msra.mxu0 %v1136
    %1237 = vmatprep.mubr.f32.mxu0 %v1102
    %1238 = vmatmul.mubr.f32.gmra.mrb[0].mxu0 %v1101
    %v1239 = vpop.f32.mrb[0].mxu0
    %v1240 = vadd.f32 %v1171, %v1239
    %v1241 = vpop.f32.mrb[0].mxu0
    %1242 = vdwg.mxu0
    %1243 = vmatprep.subr.mxu0 0.0
    %1244 = vmatpush1.msra.mxu0 %v1137
    %1245 = vmatprep.subr.mxu0 0.0
    %1246 = vmatpush1.msra.mxu0 %v1138
    %1247 = vmatprep.subr.mxu0 0.0
    %1248 = vmatpush1.msra.mxu0 %v1139
    %1249 = vmatprep.subr.mxu0 0.0
    %1250 = vmatpush1.msra.mxu0 %v1140
    %1251 = vmatprep.subr.mxu0 0.0
    %1252 = vmatpush1.msra.mxu0 %v1141
    %1253 = vmatprep.subr.mxu0 0.0
    %1254 = vmatpush1.msra.mxu0 %v1142
    %1255 = vmatprep.subr.mxu0 0.0
    %1256 = vmatpush1.msra.mxu0 %v1143
    %1257 = vmatprep.subr.mxu0 0.0
    %1258 = vmatpush1.msra.mxu0 %v1144
    %1259 = vmatprep.subr.mxu0 0.0
    %1260 = vmatpush1.msra.mxu0 %v1145
    %1261 = vmatprep.subr.mxu0 0.0
    %1262 = vmatpush1.msra.mxu0 %v1146
    %1263 = vmatprep.subr.mxu0 0.0
    %1264 = vmatpush1.msra.mxu0 %v1147
    %1265 = vmatprep.subr.mxu0 0.0
    %1266 = vmatpush1.msra.mxu0 %v1148
    %1267 = vmatprep.subr.mxu0 0.0
    %1268 = vmatpush1.msra.mxu0 %v1149
    %1269 = vmatprep.subr.mxu0 0.0
    %1270 = vmatpush1.msra.mxu0 %v1150
    %1271 = vmatprep.subr.mxu0 0.0
    %1272 = vmatpush1.msra.mxu0 %v1151
    %1273 = vmatprep.subr.mxu0 0.0
    %1274 = vmatpush1.msra.mxu0 %v1152
    %1275 = vmatprep.subr.mxu0 0.0
    %1276 = vmatpush1.msra.mxu0 %v1153
    %1277 = vmatprep.subr.mxu0 0.0
    %1278 = vmatpush1.msra.mxu0 %v1154
    %1279 = vmatprep.subr.mxu0 0.0
    %1280 = vmatpush1.msra.mxu0 %v1155
    %1281 = vmatprep.subr.mxu0 0.0
    %1282 = vmatpush1.msra.mxu0 %v1156
    %1283 = vmatprep.subr.mxu0 0.0
    %1284 = vmatpush1.msra.mxu0 %v1157
    %1285 = vmatprep.subr.mxu0 0.0
    %1286 = vmatpush1.msra.mxu0 %v1158
    %1287 = vmatprep.subr.mxu0 0.0
    %1288 = vmatpush1.msra.mxu0 %v1159
    %1289 = vmatprep.subr.mxu0 0.0
    %1290 = vmatpush1.msra.mxu0 %v1160
    %1291 = vmatprep.subr.mxu0 0.0
    %1292 = vmatpush1.msra.mxu0 %v1161
    %1293 = vmatprep.subr.mxu0 0.0
    %1294 = vmatpush1.msra.mxu0 %v1162
    %1295 = vmatprep.subr.mxu0 0.0
    %1296 = vmatpush1.msra.mxu0 %v1163
    %1297 = vmatprep.subr.mxu0 0.0
    %1298 = vmatpush1.msra.mxu0 %v1164
    %1299 = vmatprep.subr.mxu0 0.0
    %1300 = vmatpush1.msra.mxu0 %v1165
    %1301 = vmatprep.subr.mxu0 0.0
    %1302 = vmatpush1.msra.mxu0 %v1166
    %1303 = vmatprep.subr.mxu0 0.0
    %1304 = vmatpush1.msra.mxu0 %v1167
    %1305 = vmatprep.subr.mxu0 0.0
    %1306 = vmatpush1.msra.mxu0 %v1168
    %1307 = vmatprep.mubr.f32.mxu0 %v1104
    %1308 = vmatmul.mubr.f32.gmra.mrb[0].mxu0 %v1103
    %v1309 = vpop.f32.mrb[0].mxu0
    %v1310 = vadd.f32 %v1240, %v1309
    %v1311 = vpop.f32.mrb[0].mxu0
    %1312 = vdwg.mxu0
    %vm1313 = vcmask 15360
    %v1314 = vsel %vm1313, %v1310, -inf
    %v1315 = vrot.slane %v1314, 4
    %v1316 = vmax.f32 %v1314, %v1315
    %v1317 = vrot.slane %v1316, 2
    %v1318 = vmax.f32 %v1316, %v1317
    %v1319 = vrot.slane %v1318, 1
    %v1320 = vmax.f32 %v1318, %v1319
    %v1321 = vsub.f32 %v1310, %v1320
    %v1322 = vmul.f32 %v1321, 1.442695
    %v1323 = vpow.pop %v1322
    %v1324 = vsel %vm1313, %v1323, 0.0
    %v1325 = vrot.slane %v1324, 4
    %v1326 = vadd.f32 %v1324, %v1325
    %v1327 = vrot.slane %v1326, 2
    %v1328 = vadd.f32 %v1326, %v1327
    %v1329 = vrot.slane %v1328, 1
    %v1330 = vadd.f32 %v1328, %v1329
    %v1331 = vlog2.pop %v1330
    %v1332 = vmul.f32 %v1331, 0.6931472
    %v1333 = vadd.f32 %v1320, %v1332
    %v1334 = vsub.f32 %v1310, %v1333
    %1335 = vst.msk [vmem:[%s5] sm:$0xff] %vm1313, %v1334
    // Predicated region
    $region26: #{_lambda_.1} parent=1 // pred_check
      _
    $region27: #{_lambda_.1} parent=1 // pred_check_branch
      %1337 = sbr.rel (0) target = $region29
    $region28: #{_lambda_.1} parent=1 // pred_region
      _
    $region29: #{_lambda_.1} parent=1 // pred_fallthru
      _
    // Predicated region
    $region30: #{_lambda_.1} parent=1 // pred_check
      _
    $region31: #{_lambda_.1} parent=1 // pred_check_branch
      %1339 = sbr.rel (0) target = $region33
    $region32: #{_lambda_.1} parent=1 // pred_region
      _
    $region33: #{_lambda_.1} parent=1 // pred_fallthru
      _
    %1340 = vsyncpa [#allocation5], 1

</llo_original>
